<compile_context>
chip_gen: v7x
topology: tpu7x:2x2x1
jax: 0.10.0
libtpu: 0.0.40
codegen_flags: <defaults>
</compile_context>

<pallas_src>
import functools

import jax
import jax.numpy as jnp
from jax.experimental import pallas as pl
from jax.experimental.pallas import tpu as pltpu


# ---------------------------------------------------------------------------
# Fused Pallas kernel: conv (as matmul) + bias + ReLU + flatten + FC tile
# ---------------------------------------------------------------------------
def _make_fused_kernel(n_batch, c_out, howo):
    def kernel(pt_ref, wc_ref, bc_ref, wf_hbm, bf_ref, o_ref, wf_vmem, dma_sem):
        j = pl.program_id(0)

        # Kick off this step's 2 MiB fc-weight tile DMA first; everything up to
        # cp.wait() executes under its shadow (the DMA is the critical path).
        cp = pltpu.make_async_copy(wf_hbm.at[j], wf_vmem, dma_sem)
        cp.start()

        # Conv as matmul: (C_out, C*K*K) @ (C*K*K, N*Ho*Wo), bf16 x bf16 -> f32.
        act = jnp.dot(wc_ref[...], pt_ref[...],
                      preferred_element_type=jnp.float32)
        act = jnp.maximum(act + bc_ref[...], 0.0)            # bias + ReLU in VMEM

        # PyTorch x.view(N, -1) of the NCHW conv output:
        #   x_flat[n, c*HoWo + r] = act[c, n*HoWo + r]
        # Static lane slices + concats (16 KB relayout); fully hidden under the
        # in-flight fc-weight DMA above, never round-trips HBM.
        rows = []
        for nb in range(n_batch):
            pieces = [act[c:c + 1, nb * howo:(nb + 1) * howo]
                      for c in range(c_out)]
            rows.append(jnp.concatenate(pieces, axis=1))      # (1, C_out*HoWo)
        x_flat = jnp.concatenate(rows, axis=0).astype(jnp.bfloat16)   # (N, D)

        # FC tile: bf16 x bf16 MXU matmul with f32 accumulation.
        cp.wait()
        out = jnp.dot(x_flat, wf_vmem[...],
                      preferred_element_type=jnp.float32)
        o_ref[...] = out + bf_ref[...]                        # lane-dense store

    return kernel


# ---------------------------------------------------------------------------
# Wrapper-side glue
# ---------------------------------------------------------------------------
def _im2col_t(x, kh, kw, stride, pad):
    """x: (N,C,H,W) -> patches^T (C*kh*kw, N*Ho*Wo) in bf16.

    Row order (c, kh, kw) matches conv_w.reshape(C_out, -1); column order is
    (n, ho, wo).  With allow_input_fusion this chain fuses into the kernel input.
    """
    n, c, h, w = x.shape
    xp = jnp.pad(x, ((0, 0), (0, 0), (pad, pad), (pad, pad)))
    ho = (h + 2 * pad - kh) // stride + 1
    wo = (w + 2 * pad - kw) // stride + 1
    cols = []
    for i in range(kh):
        for j in range(kw):
            cols.append(xp[:, :, i:i + stride * ho:stride, j:j + stride * wo:stride])
    cols = jnp.stack(cols, axis=0).reshape(kh, kw, n, c, ho, wo)
    p_t = cols.transpose(3, 0, 1, 2, 4, 5).reshape(c * kh * kw, n * ho * wo)
    return p_t.astype(jnp.bfloat16), ho, wo


def prepare_params(params, tile_f=512):
    """One-time weight prep (kept OUT of the per-call hot path):
    - conv weight flattened + bf16
    - fc weight transposed, cast to bf16, and PRE-TILED contiguously in HBM as
      (F//tile_f, D, tile_f) so each grid step's DMA is one long burst."""
    conv_w = params["conv_w"]
    c_out = conv_w.shape[0]
    fc_w = params["fc_w"]
    f, d = fc_w.shape
    assert f % tile_f == 0 and tile_f % 128 == 0
    n_tiles = f // tile_f
    wf_t = fc_w.T.astype(jnp.bfloat16)                                  # (D, F)
    wf_tiled = wf_t.reshape(d, n_tiles, tile_f).transpose(1, 0, 2)      # (T, D, tf)
    return {
        "wc": conv_w.reshape(c_out, -1).astype(jnp.bfloat16),           # (C_out, C*K*K)
        "bc": params["conv_b"].reshape(c_out, 1).astype(jnp.float32),
        "wf": wf_tiled,                                                 # bf16, contiguous tiles
        "bf": params["fc_b"].reshape(1, -1).astype(jnp.float32),
    }


@functools.partial(jax.jit, static_argnames=("kernel_size", "stride", "padding"))
def branch_forward(x, prepped, *, kernel_size=3, stride=1, padding=1):
    """relu(conv2d(x)) -> flatten -> fc, as a single fused Pallas kernel."""
    wc, bc, wf, bf = prepped["wc"], prepped["bc"], prepped["wf"], prepped["bf"]
    n = x.shape[0]
    c_out, ckk = wc.shape
    n_tiles, d, tile_f = wf.shape
    f = n_tiles * tile_f

    p_t, ho, wo = _im2col_t(x, kernel_size, kernel_size, stride, padding)
    r = n * ho * wo
    assert d == c_out * ho * wo

    kernel = _make_fused_kernel(n, c_out, ho * wo)
    cost = pl.CostEstimate(
        flops=n_tiles * 2 * c_out * ckk * r + 2 * n * d * f,
        transcendentals=0,
        bytes_accessed=p_t.size * 2 + wc.size * 2 + wf.size * 2
        + bf.size * 4 + n * f * 4,
    )

    return pl.pallas_call(
        kernel,
        out_shape=jax.ShapeDtypeStruct((n, f), jnp.float32),
        grid=(n_tiles,),
        in_specs=[
            pl.BlockSpec((ckk, r), lambda j: (0, 0)),        # patches^T (bf16, resident)
            pl.BlockSpec((c_out, ckk), lambda j: (0, 0)),    # conv weight (bf16)
            pl.BlockSpec((c_out, 1), lambda j: (0, 0)),      # conv bias
            pl.BlockSpec(memory_space=pl.ANY),               # fc weight tiles stay in HBM
            pl.BlockSpec((1, tile_f), lambda j: (0, j)),     # fc bias tile
        ],
        out_specs=pl.BlockSpec((n, tile_f), lambda j: (0, j)),   # lane-dense stores
        scratch_shapes=[
            pltpu.VMEM((d, tile_f), jnp.bfloat16),           # landing buffer for fc-w tile
            pltpu.SemaphoreType.DMA,
        ],
        compiler_params=pltpu.CompilerParams(
            dimension_semantics=("parallel",),               # v7x: 1 tile per TensorCore
            vmem_limit_bytes=12 * 1024 * 1024,               # 2 MiB tile + small constants
            allow_input_fusion=[True, False, False, False, False],
        ),
        cost_estimate=cost,
    )(p_t, wc, bc, wf, bf)


# ---------------------------------------------------------------------------
# Main
# ---------------------------------------------------------------------------
if __name__ == "__main__":
    # Module hyperparameters (the original file leaves them as free names):
    # in_channels=4, out_channels=8, kernel_size=3, stride=1, padding=1
    N, C_IN, H, W = 2, 4, 16, 16
    C_OUT, K, STRIDE, PAD = 8, 3, 1, 1
    H_OUT = (H + 2 * PAD - K) // STRIDE + 1
    W_OUT = (W + 2 * PAD - K) // STRIDE + 1
    OUTPUT_SIZE = C_OUT * H_OUT * W_OUT   # fc input size
    FC_OUT = 1024

    key = jax.random.PRNGKey(0)
    keys = jax.random.split(key, 9)
    x = jax.random.normal(keys[0], (N, C_IN, H, W), dtype=jnp.float32)

    def make_branch_params(kc, kb, kfw, kfb):
        return {
            "conv_w": 0.1 * jax.random.normal(kc, (C_OUT, C_IN, K, K), dtype=jnp.float32),
            "conv_b": 0.1 * jax.random.normal(kb, (C_OUT,), dtype=jnp.float32),
            "fc_w": 0.05 * jax.random.normal(kfw, (FC_OUT, OUTPUT_SIZE), dtype=jnp.float32),
            "fc_b": 0.05 * jax.random.normal(kfb, (FC_OUT,), dtype=jnp.float32),
        }

    # branch1 = CropResizeBranch, branch2 = EraseComplementaryBranch (distinct weights)
    branch_params = [make_branch_params(*keys[1:5]), make_branch_params(*keys[5:9])]

    outs = []
    for params in branch_params:
        prepped = prepare_params(params, tile_f=512)   # one-time weight prep
        out = branch_forward(x, prepped, kernel_size=K, stride=STRIDE, padding=PAD)
        out = jax.block_until_ready(out)
        assert out.shape == (N, FC_OUT), out.shape
        outs.append((out, params))

    # Reference check in plain JAX (same semantics as the PyTorch module),
    # computed at full f32 precision.  The kernel uses bf16 operands for both
    # matmuls (f32 accumulation), hence the tolerance.
    for out, params in outs:
        conv_ref = jax.lax.conv_general_dilated(
            x, params["conv_w"], window_strides=(STRIDE, STRIDE),
            padding=((PAD, PAD), (PAD, PAD)),
            dimension_numbers=("NCHW", "OIHW", "NCHW"),
            precision=jax.lax.Precision.HIGHEST,
        ) + params["conv_b"][None, :, None, None]
        conv_ref = jnp.maximum(conv_ref, 0.0)
        ref = jnp.dot(conv_ref.reshape(N, -1), params["fc_w"].T,
                      precision=jax.lax.Precision.HIGHEST) + params["fc_b"]
        err = float(jnp.max(jnp.abs(out - ref)))
        assert jnp.allclose(out, ref, atol=2e-2, rtol=2e-2), err

    print("KERNEL_OK")
</pallas_src>

<mosaic_0001>
module attributes {stable_mosaic.version = 11 : i64} {
  func.func @kernel(%arg0: i32, %arg1: memref<36x512xbf16, #tpu.memory_space<vmem>>, %arg2: memref<8x36xbf16, #tpu.memory_space<vmem>>, %arg3: memref<8x1xf32, #tpu.memory_space<vmem>>, %arg4: memref<2x2048x512xbf16, #tpu.memory_space<any>>, %arg5: memref<1x512xf32, #tpu.memory_space<vmem>>, %arg6: memref<2x512xf32, #tpu.memory_space<vmem>>, %arg7: memref<2048x512xbf16, #tpu.memory_space<vmem>>, %arg8: memref<!tpu.dma_semaphore, #tpu.memory_space<semaphore_mem>>) attributes {dimension_semantics = [#tpu.dimension_semantics<parallel>], iteration_bounds = array<i64: 2>, scalar_prefetch = 0 : i64, scratch_operands = 2 : i64, tpu.core_type = #tpu.core_type<tc>, window_params = [{pipeline_mode = #tpu.pipeline_mode<synchronous>, transform_indices = @transform_0, window_bounds = array<i64: 36, 512>}, {pipeline_mode = #tpu.pipeline_mode<synchronous>, transform_indices = @transform_1, window_bounds = array<i64: 8, 36>}, {pipeline_mode = #tpu.pipeline_mode<synchronous>, transform_indices = @transform_2, window_bounds = array<i64: 8, 1>}, {}, {transform_indices = @transform_4, window_bounds = array<i64: 1, 512>}, {transform_indices = @transform_5, window_bounds = array<i64: 2, 512>}]} {
    %c0_i32 = arith.constant 0 : i32
    %c0_i32_0 = arith.constant 0 : i32
    %0 = tpu.memref_slice %arg4[%arg0, %c0_i32, %c0_i32_0] : memref<2x2048x512xbf16, #tpu.memory_space<any>> -> memref<1x2048x512xbf16, #tpu.memory_space<any>>
    %1 = tpu.memref_squeeze %0 : memref<1x2048x512xbf16, #tpu.memory_space<any>> -> memref<2048x512xbf16, #tpu.memory_space<any>>
    tpu.enqueue_dma source(%1 : memref<2048x512xbf16, #tpu.memory_space<any>>) target(%arg7 : memref<2048x512xbf16, #tpu.memory_space<vmem>>) target_semaphore(%arg8 : memref<!tpu.dma_semaphore, #tpu.memory_space<semaphore_mem>>)
    %c0 = arith.constant 0 : index
    %c0_1 = arith.constant 0 : index
    %2 = vector.load %arg2[%c0, %c0_1] : memref<8x36xbf16, #tpu.memory_space<vmem>>, vector<8x36xbf16>
    %c0_2 = arith.constant 0 : index
    %c0_3 = arith.constant 0 : index
    %3 = vector.load %arg1[%c0_2, %c0_3] : memref<36x512xbf16, #tpu.memory_space<vmem>>, vector<36x512xbf16>
    %cst = arith.constant dense<0.000000e+00> : vector<8x512xf32>
    %4 = tpu.matmul %2, %3, %cst {dimension_numbers = #tpu.dot_dimension_numbers<[1], [0], [0], [1], [0, 0, 1, 1], [], []>} : vector<8x36xbf16>, vector<36x512xbf16>, vector<8x512xf32> -> vector<8x512xf32>
    %c0_4 = arith.constant 0 : index
    %c0_5 = arith.constant 0 : index
    %5 = vector.load %arg3[%c0_4, %c0_5] : memref<8x1xf32, #tpu.memory_space<vmem>>, vector<8x1xf32>
    %6 = vector.broadcast %5 : vector<8x1xf32> to vector<8x512xf32>
    %7 = arith.addf %4, %6 : vector<8x512xf32>
    %cst_6 = arith.constant 0.000000e+00 : f32
    %8 = vector.broadcast %cst_6 : f32 to vector<8x512xf32>
    %9 = arith.maximumf %7, %8 : vector<8x512xf32>
    %10 = vector.extract_strided_slice %9 {offsets = [0, 0], sizes = [1, 256], strides = [1, 1]} : vector<8x512xf32> to vector<1x256xf32>
    %11 = vector.extract_strided_slice %9 {offsets = [1, 0], sizes = [1, 256], strides = [1, 1]} : vector<8x512xf32> to vector<1x256xf32>
    %12 = vector.extract_strided_slice %9 {offsets = [2, 0], sizes = [1, 256], strides = [1, 1]} : vector<8x512xf32> to vector<1x256xf32>
    %13 = vector.extract_strided_slice %9 {offsets = [3, 0], sizes = [1, 256], strides = [1, 1]} : vector<8x512xf32> to vector<1x256xf32>
    %14 = vector.extract_strided_slice %9 {offsets = [4, 0], sizes = [1, 256], strides = [1, 1]} : vector<8x512xf32> to vector<1x256xf32>
    %15 = vector.extract_strided_slice %9 {offsets = [5, 0], sizes = [1, 256], strides = [1, 1]} : vector<8x512xf32> to vector<1x256xf32>
    %16 = vector.extract_strided_slice %9 {offsets = [6, 0], sizes = [1, 256], strides = [1, 1]} : vector<8x512xf32> to vector<1x256xf32>
    %17 = vector.extract_strided_slice %9 {offsets = [7, 0], sizes = [1, 256], strides = [1, 1]} : vector<8x512xf32> to vector<1x256xf32>
    %18 = tpu.concatenate %10, %11, %12, %13, %14, %15, %16, %17 in 1 : vector<1x256xf32>, vector<1x256xf32>, vector<1x256xf32>, vector<1x256xf32>, vector<1x256xf32>, vector<1x256xf32>, vector<1x256xf32>, vector<1x256xf32> -> vector<1x2048xf32>
    %19 = vector.extract_strided_slice %9 {offsets = [0, 256], sizes = [1, 256], strides = [1, 1]} : vector<8x512xf32> to vector<1x256xf32>
    %20 = vector.extract_strided_slice %9 {offsets = [1, 256], sizes = [1, 256], strides = [1, 1]} : vector<8x512xf32> to vector<1x256xf32>
    %21 = vector.extract_strided_slice %9 {offsets = [2, 256], sizes = [1, 256], strides = [1, 1]} : vector<8x512xf32> to vector<1x256xf32>
    %22 = vector.extract_strided_slice %9 {offsets = [3, 256], sizes = [1, 256], strides = [1, 1]} : vector<8x512xf32> to vector<1x256xf32>
    %23 = vector.extract_strided_slice %9 {offsets = [4, 256], sizes = [1, 256], strides = [1, 1]} : vector<8x512xf32> to vector<1x256xf32>
    %24 = vector.extract_strided_slice %9 {offsets = [5, 256], sizes = [1, 256], strides = [1, 1]} : vector<8x512xf32> to vector<1x256xf32>
    %25 = vector.extract_strided_slice %9 {offsets = [6, 256], sizes = [1, 256], strides = [1, 1]} : vector<8x512xf32> to vector<1x256xf32>
    %26 = vector.extract_strided_slice %9 {offsets = [7, 256], sizes = [1, 256], strides = [1, 1]} : vector<8x512xf32> to vector<1x256xf32>
    %27 = tpu.concatenate %19, %20, %21, %22, %23, %24, %25, %26 in 1 : vector<1x256xf32>, vector<1x256xf32>, vector<1x256xf32>, vector<1x256xf32>, vector<1x256xf32>, vector<1x256xf32>, vector<1x256xf32>, vector<1x256xf32> -> vector<1x2048xf32>
    %28 = tpu.concatenate %18, %27 in 0 : vector<1x2048xf32>, vector<1x2048xf32> -> vector<2x2048xf32>
    %29 = arith.truncf %28 : vector<2x2048xf32> to vector<2x2048xbf16>
    %c0_i32_7 = arith.constant 0 : i32
    %c0_i32_8 = arith.constant 0 : i32
    %30 = tpu.memref_slice %arg4[%arg0, %c0_i32_7, %c0_i32_8] : memref<2x2048x512xbf16, #tpu.memory_space<any>> -> memref<1x2048x512xbf16, #tpu.memory_space<any>>
    %31 = tpu.memref_squeeze %30 : memref<1x2048x512xbf16, #tpu.memory_space<any>> -> memref<2048x512xbf16, #tpu.memory_space<any>>
    tpu.wait_dma2 semaphore(%arg8 : memref<!tpu.dma_semaphore, #tpu.memory_space<semaphore_mem>>) src(%31 : memref<2048x512xbf16, #tpu.memory_space<any>>) dst(%arg7 : memref<2048x512xbf16, #tpu.memory_space<vmem>>)
    %c0_9 = arith.constant 0 : index
    %c0_10 = arith.constant 0 : index
    %32 = vector.load %arg7[%c0_9, %c0_10] : memref<2048x512xbf16, #tpu.memory_space<vmem>>, vector<2048x512xbf16>
    %cst_11 = arith.constant dense<0.000000e+00> : vector<2x512xf32>
    %33 = tpu.matmul %29, %32, %cst_11 {dimension_numbers = #tpu.dot_dimension_numbers<[1], [0], [0], [1], [0, 0, 1, 1], [], []>} : vector<2x2048xbf16>, vector<2048x512xbf16>, vector<2x512xf32> -> vector<2x512xf32>
    %c0_12 = arith.constant 0 : index
    %c0_13 = arith.constant 0 : index
    %34 = vector.load %arg5[%c0_12, %c0_13] : memref<1x512xf32, #tpu.memory_space<vmem>>, vector<1x512xf32>
    %35 = vector.broadcast %34 : vector<1x512xf32> to vector<2x512xf32>
    %36 = arith.addf %33, %35 : vector<2x512xf32>
    %c0_14 = arith.constant 0 : index
    %c0_15 = arith.constant 0 : index
    %37 = vector.load %arg6[%c0_14, %c0_15] : memref<2x512xf32, #tpu.memory_space<vmem>>, vector<2x512xf32>
    tpu.vector_store %arg6[%c0_14, %c0_15], %36 {strides = array<i32>} : memref<2x512xf32, #tpu.memory_space<vmem>>, vector<2x512xf32>,
    return
  }
  func.func @transform_0(%arg0: i32) -> (i32, i32) {
    %c0_i32 = arith.constant 0 : i32
    %c0_i32_0 = arith.constant 0 : i32
    %c0_i32_1 = arith.constant 0 : i32
    return %c0_i32, %c0_i32_0 : i32, i32
  }
  func.func @transform_1(%arg0: i32) -> (i32, i32) {
    %c0_i32 = arith.constant 0 : i32
    %c0_i32_0 = arith.constant 0 : i32
    %c0_i32_1 = arith.constant 0 : i32
    return %c0_i32, %c0_i32_0 : i32, i32
  }
  func.func @transform_2(%arg0: i32) -> (i32, i32) {
    %c0_i32 = arith.constant 0 : i32
    %c0_i32_0 = arith.constant 0 : i32
    %c0_i32_1 = arith.constant 0 : i32
    return %c0_i32, %c0_i32_0 : i32, i32
  }
  func.func @transform_4(%arg0: i32) -> (i32, i32) {
    %c0_i32 = arith.constant 0 : i32
    %c0_i32_0 = arith.constant 0 : i32
    return %c0_i32, %arg0 : i32, i32
  }
  func.func @transform_5(%arg0: i32) -> (i32, i32) {
    %c0_i32 = arith.constant 0 : i32
    %c0_i32_0 = arith.constant 0 : i32
    return %c0_i32, %arg0 : i32, i32
  }
}

</mosaic_0001>

<llo_original>
// kernel: branch_forward.1
$region0: #{branch_forward.1}
  #allocation0 [shape = 'u32[]', space=smem, size = 0x4, offset = 0x4, fixed_abs, tag = 'smem constant byte address 0x4 - core index']
  #allocation1 [shape = 'u32[144,128]{1,0:T(1,128)}', space=vmem, size = 0x12000, scoped, tag = 'internal scratch']
  #allocation2 [shape = 'bf16[2048,512]{1,0:T(16,128)(2,1)}', space=vmem, size = 0x200000, scoped, tag = 'scratch operand']
  #allocation3 [shape = 's32[1]{0}', space=sflag, size = 0x4, scoped, tag = 'scratch operand']
  #allocation10 [shape = 's32[]', space=sflag, size = 0x4, offset = 0, fixed_abs, tag = 'sflag constant byte address 0x0 - dummy sync flag']
  %s0 = inlined_call_operand.vmem [shape: bf16[36,512], index: 0, kind: input, shape index: {}]
  %s1 = inlined_call_operand.hbm [shape: bf16[8,36], index: 1, kind: input, shape index: {}]
  %s2 = inlined_call_operand.vmem [shape: f32[8,1], index: 2, kind: input, shape index: {}]
  %s3 = inlined_call_operand.hbm [shape: bf16[2,2048,512], index: 3, kind: input, shape index: {}]
  %s4 = inlined_call_operand.hbm [shape: f32[1,1024], index: 4, kind: input, shape index: {}]
  %s5 = inlined_call_operand.hbm [shape: f32[2,1024], index: 5, kind: output, shape index: {}]
  %s6 = sld [smem:[#allocation0]]
  $region57: #{branch_forward.1} parent=0
    _
  %s8 = ssub.s32 1, %s6
  %s9 = scalar_select 0, %s8, %s6
  $region1: #{branch_forward.1} parent=0
    #allocation4 [shape = 'u8[2048]{0}', space=vmem, size = 0x800, scoped, tag = 'input window, operand 1, single buffered']
    #allocation5 [shape = 's32[2]{0}', space=sflag, size = 0x8, scoped, tag = 'scoped memory for branch_forward.1']
    #allocation6 [shape = 's32[2]{0}', space=sflag, size = 0x8, scoped, tag = 'scoped memory for branch_forward.1']
    #allocation7 [shape = 'u8[4096]{0}', space=vmem, size = 0x1000, scoped, tag = 'input window, operand 4']
    #allocation8 [shape = 's32[2]{0}', space=sflag, size = 0x8, scoped, tag = 'scoped memory for branch_forward.1']
    #allocation9 [shape = 'u8[8192]{0}', space=vmem, size = 0x2000, scoped, tag = 'output window, operand 0']
    %10 = vsyncpa [#allocation5], 0
    %11 = vsyncpa [#allocation8], 0
    %s12 = scalar_lea.sflag [#allocation8], 1
    %13 = vsyncpa %s12, 0
    %14 = vsyncpa [#allocation6], 0
    %s15 = scalar_lea.sflag [#allocation6], 1
    %16 = vsyncpa %s15, 0
    loop: start=0, step=1, limit=4
    $region2: #{branch_forward.1} parent=1 // loop_pre_header
      _
    $region3: #{branch_forward.1} parent=1 // loop_header
      %s18 = sphi 0, %s22
      %p19 = scmp.ge.s32.totalorder %s18, 4
      %s26 = sphi 0, %s26
      %s28 = sphi 0, %s26
      %s29 = sphi 0, %s28
      %s43 = sphi 0, %s29
      %s47 = sphi 0, %s47
      %s49 = sphi 0, %s47
      %s50 = sphi 0, %s49
      %s64 = sphi 0, %s50
      %s68 = sphi 0, %s68
      %s70 = sphi 0, %s68
      %s71 = sphi 0, %s70
      %s85 = sphi 0, %s71
      %s91 = sphi 0, %s93
      %s94 = sphi 0, %s91
      %s95 = sphi 0, %s94
      %s111 = sphi 0, %s95
      %s117 = sphi 0, %s119
      %s120 = sphi 0, %s117
      %s121 = sphi 0, %s120
      %s137 = sphi 0, %s121
    $region4: #{branch_forward.1} parent=1 // loop_header_branch
      %21 = sbr.rel (%p19) target = $region8
    $region5: #{branch_forward.1} parent=1 // loop_body
      %s23 = ssub.s32 %s18, 1
      %s24 = ssub.s32 %s18, 2
      %s25 = sadd.s32 %s18, 1
      %s27 = sadd.s32 %s26, 1
      %p30 = scmp.eq.s32.totalorder %s18, 1
      %p31 = scmp.ne.s32.totalorder %s26, %s28
      %p32 = scmp.eq.s32.totalorder %s18, 0
      %p33 = por %p31, %p32
      %p34 = scmp.ne.s32.totalorder %s26, %s28
      %p35 = scmp.eq.s32.totalorder %s23, 1
      %p36 = por %p34, %p35
      %p37 = scmp.ne.s32.totalorder %s28, %s29
      %p38 = scmp.eq.s32.totalorder %s23, 0
      %p39 = por %p37, %p38
      %p40 = scmp.ne.s32.totalorder %s28, %s29
      %p41 = scmp.eq.s32.totalorder %s24, 1
      %p42 = por %p40, %p41
      %p44 = scmp.ne.s32.totalorder %s29, %s43
      %p45 = scmp.eq.s32.totalorder %s24, 0
      %p46 = por %p44, %p45
      %s48 = sadd.s32 %s47, 1
      %p51 = scmp.eq.s32.totalorder %s18, 1
      %p52 = scmp.ne.s32.totalorder %s47, %s49
      %p53 = scmp.eq.s32.totalorder %s18, 0
      %p54 = por %p52, %p53
      %p55 = scmp.ne.s32.totalorder %s47, %s49
      %p56 = scmp.eq.s32.totalorder %s23, 1
      %p57 = por %p55, %p56
      %p58 = scmp.ne.s32.totalorder %s49, %s50
      %p59 = scmp.eq.s32.totalorder %s23, 0
      %p60 = por %p58, %p59
      %p61 = scmp.ne.s32.totalorder %s49, %s50
      %p62 = scmp.eq.s32.totalorder %s24, 1
      %p63 = por %p61, %p62
      %p65 = scmp.ne.s32.totalorder %s50, %s64
      %p66 = scmp.eq.s32.totalorder %s24, 0
      %p67 = por %p65, %p66
      %s69 = sadd.s32 %s68, 1
      %p72 = scmp.eq.s32.totalorder %s18, 1
      %p73 = scmp.ne.s32.totalorder %s68, %s70
      %p74 = scmp.eq.s32.totalorder %s18, 0
      %p75 = por %p73, %p74
      %p76 = scmp.ne.s32.totalorder %s68, %s70
      %p77 = scmp.eq.s32.totalorder %s23, 1
      %p78 = por %p76, %p77
      %p79 = scmp.ne.s32.totalorder %s70, %s71
      %p80 = scmp.eq.s32.totalorder %s23, 0
      %p81 = por %p79, %p80
      %p82 = scmp.ne.s32.totalorder %s70, %s71
      %p83 = scmp.eq.s32.totalorder %s24, 1
      %p84 = por %p82, %p83
      %p86 = scmp.ne.s32.totalorder %s71, %s85
      %p87 = scmp.eq.s32.totalorder %s24, 0
      %p88 = por %p86, %p87
      %s89 = ssub.s32 %s18, %s25
      %p90 = scmp.eq.s32.totalorder %s89, 0
      %s92 = sadd.s32 %s91, 1
      %s93 = scalar_select %p90, %s91, %s92
      %p96 = pneg %p90
      %p97 = scmp.eq.s32.totalorder %s18, 1
      %p98 = por %p96, %p97
      %p99 = scmp.ne.s32.totalorder %s91, %s94
      %p100 = scmp.eq.s32.totalorder %s18, 0
      %p101 = por %p99, %p100
      %p102 = scmp.ne.s32.totalorder %s91, %s94
      %p103 = scmp.eq.s32.totalorder %s23, 1
      %p104 = por %p102, %p103
      %p105 = scmp.ne.s32.totalorder %s94, %s95
      %p106 = scmp.eq.s32.totalorder %s23, 0
      %p107 = por %p105, %p106
      %p108 = scmp.ne.s32.totalorder %s94, %s95
      %p109 = scmp.eq.s32.totalorder %s24, 1
      %p110 = por %p108, %p109
      %p112 = scmp.ne.s32.totalorder %s95, %s111
      %p113 = scmp.eq.s32.totalorder %s24, 0
      %p114 = por %p112, %p113
      %s115 = ssub.s32 %s18, %s25
      %p116 = scmp.eq.s32.totalorder %s115, 0
      %s118 = sadd.s32 %s117, 1
      %s119 = scalar_select %p116, %s117, %s118
      %p122 = pneg %p116
      %p123 = scmp.eq.s32.totalorder %s18, 1
      %p124 = por %p122, %p123
      %p125 = scmp.ne.s32.totalorder %s117, %s120
      %p126 = scmp.eq.s32.totalorder %s18, 0
      %p127 = por %p125, %p126
      %p128 = scmp.ne.s32.totalorder %s117, %s120
      %p129 = scmp.eq.s32.totalorder %s23, 1
      %p130 = por %p128, %p129
      %p131 = scmp.ne.s32.totalorder %s120, %s121
      %p132 = scmp.eq.s32.totalorder %s23, 0
      %p133 = por %p131, %p132
      %p134 = scmp.ne.s32.totalorder %s120, %s121
      %p135 = scmp.eq.s32.totalorder %s24, 1
      %p136 = por %p134, %p135
      %p138 = scmp.ne.s32.totalorder %s121, %s137
      %p139 = scmp.eq.s32.totalorder %s24, 0
      %p140 = por %p138, %p139
      %p141 = scmp.le.s32.totalorder 1, %s18
      %p142 = scmp.lt.s32.totalorder %s18, 3
      %p143 = pnand %p141, %p142
      %p144 = pneg %p143
      // Predicated region
      $region9: #{branch_forward.1} parent=5 // pred_check
        _
      $region10: #{branch_forward.1} parent=5 // pred_check_branch
        %146 = sbr.rel (%p143) target = $region12
      $region11: #{branch_forward.1} parent=5 // pred_region
        %s147 = ssub.s32 %s18, 1
        // Predicated region
        $region13: #{branch_forward.1} parent=11 // pred_check
          %p148 = pneg %p39
        $region14: #{branch_forward.1} parent=11 // pred_check_branch
          %150 = sbr.rel (%p148) target = $region16
        $region15: #{branch_forward.1} parent=11 // pred_region
          _
        $region16: #{branch_forward.1} parent=11 // pred_fallthru
          _
        // Predicated region
        $region17: #{branch_forward.1} parent=11 // pred_check
          %p151 = pneg %p60
        $region18: #{branch_forward.1} parent=11 // pred_check_branch
          %153 = sbr.rel (%p151) target = $region20
        $region19: #{branch_forward.1} parent=11 // pred_region
          %s155 = ssub.s32 64, 64
          %156 = vsyncadd [#allocation5], %s155
          %s158 = sshll.u32 [#allocation4], 4
          %s159 = int_to_ptr.vmem [resolvable:$true] %s158
          %161 = dma.hbm_to_vmem [thread:$0]  %s1, 64, %s159, [#allocation5]
        $region20: #{branch_forward.1} parent=11 // pred_fallthru
          _
        // Predicated region
        $region21: #{branch_forward.1} parent=11 // pred_check
          %p162 = pneg %p81
        $region22: #{branch_forward.1} parent=11 // pred_check_branch
          %164 = sbr.rel (%p162) target = $region24
        $region23: #{branch_forward.1} parent=11 // pred_region
          _
        $region24: #{branch_forward.1} parent=11 // pred_fallthru
          _
      $region12: #{branch_forward.1} parent=5 // pred_fallthru
        _
      %p165 = scmp.lt.s32.totalorder %s18, 2
      // Predicated region
      $region25: #{branch_forward.1} parent=5 // pred_check
        %p166 = pneg %p165
      $region26: #{branch_forward.1} parent=5 // pred_check_branch
        %168 = sbr.rel (%p166) target = $region28
      $region27: #{branch_forward.1} parent=5 // pred_region
        // Predicated region
        $region29: #{branch_forward.1} parent=27 // pred_check
          %p169 = pneg %p101
        $region30: #{branch_forward.1} parent=27 // pred_check_branch
          %171 = sbr.rel (%p169) target = $region32
        $region31: #{branch_forward.1} parent=27 // pred_region
          %s172 = sand.u32 %s91, 1
          %s173 = scalar_lea.sflag [#allocation8], %s172
          %s174 = sand.u32 %s91, 1
          %s175 = smul.addr %s174, 4
          %s176 = scalar_lea.vmem [#allocation7], %s175
          %s177 = smul.u32 4, %s18
          %s179 = ssub.s32 64, 64
          %180 = vsyncadd %s173, %s179
          %s181 = smul.addr %s177, 16
          %s182 = scalar_lea.hbm %s4, %s181
          %s184 = sshll.u32 %s176, 4
          %s185 = int_to_ptr.vmem [resolvable:$true] %s184
          %187 = dma.hbm_to_vmem [thread:$0]  %s182, 64, %s185, %s173
        $region32: #{branch_forward.1} parent=27 // pred_fallthru
          _
      $region28: #{branch_forward.1} parent=5 // pred_fallthru
        _
      %p188 = scmp.le.s32.totalorder 1, %s18
      %p189 = scmp.lt.s32.totalorder %s18, 3
      %p190 = pnand %p188, %p189
      %p191 = pneg %p190
      // Predicated region
      $region33: #{branch_forward.1} parent=5 // pred_check
        _
      $region34: #{branch_forward.1} parent=5 // pred_check_branch
        %193 = sbr.rel (%p190) target = $region36
      $region35: #{branch_forward.1} parent=5 // pred_region
        #allocation11 [shape = 'u32[9]{0}', space=smem, size = 0x24, scoped, tag = 'DMA stride descriptor']
        %s194 = ssub.s32 %s18, 1
        // Predicated region
        $region37: #{branch_forward.1} parent=35 // pred_check
          %p195 = pneg %p60
        $region38: #{branch_forward.1} parent=35 // pred_check_branch
          %197 = sbr.rel (%p195) target = $region40
        $region39: #{branch_forward.1} parent=35 // pred_region
          %198 = dma.done [#allocation5], 64
        $region40: #{branch_forward.1} parent=35 // pred_fallthru
          _
        %s199 = sand.u32 %s94, 1
        %s200 = scalar_lea.sflag [#allocation8], %s199
        %s201 = sand.u32 %s94, 1
        %s202 = smul.addr %s201, 4
        %s203 = scalar_lea.vmem [#allocation7], %s202
        // Predicated region
        $region41: #{branch_forward.1} parent=35 // pred_check
          %p204 = pneg %p107
        $region42: #{branch_forward.1} parent=35 // pred_check_branch
          %206 = sbr.rel (%p204) target = $region44
        $region43: #{branch_forward.1} parent=35 // pred_region
          %207 = dma.done %s200, 64
        $region44: #{branch_forward.1} parent=35 // pred_fallthru
          _
        %p208 = pneg %p39
        %p209 = pneg %p36
        %p210 = pneg %p60
        %p211 = pneg %p57
        %p212 = pneg %p81
        %p213 = pneg %p78
        %s214 = sand.u32 %s94, 1
        %s215 = scalar_lea.sflag [#allocation8], %s214
        %s216 = sand.u32 %s94, 1
        %s217 = smul.addr %s216, 4
        %s218 = scalar_lea.vmem [#allocation7], %s217
        %p219 = pneg %p107
        %p220 = pneg %p104
        %p221 = pneg %p133
        %p222 = pneg %p130
        %s223 = sand.u32 %s120, 1
        %s224 = scalar_lea.sflag [#allocation6], %s223
        %s225 = sand.u32 %s120, 1
        %s226 = smul.addr %s225, 8
        %s227 = scalar_lea.vmem [#allocation9], %s226
        %s228 = smul.u32 4, %s23
        %s229 = smul.u32 4, %s23
        %s231 = smul.u32 %s23, 1024
        %s232 = smul.addr %s231, 64
        %s233 = scalar_lea.hbm %s3, %s232
        %s235 = sshll.u32 1, 14
        %s236 = sxor.u32 4294967295, %s235
        %s238 = sld [smem:[#allocation0]]
        %s239 = sadd.s32 2, %s238
        %s241 = sshll.u32 7, 26
        %s242 = sxor.u32 4294967295, %s241
        %s243 = sand.u32 0, %s242
        %s244 = sshll.u32 %s239, 26
        %s245 = sor.u32 %s243, %s244
        %s246 = sshll.u32 [#allocation2], 4
        %s247 = int_to_ptr.vmem [resolvable:$true] %s246
        %250 = sst [smem:[#allocation11]] 512
        %s251 = scalar_lea.smem [#allocation11], 1
        %252 = sst [smem:[%s251]] 512
        %s253 = scalar_lea.smem [#allocation11], 2
        %254 = sst [smem:[%s253]] 4
        %s255 = scalar_lea.smem [#allocation11], 3
        %256 = sst [smem:[%s255]] 64
        %s257 = scalar_lea.smem [#allocation11], 4
        %258 = sst [smem:[%s257]] 128
        %s259 = scalar_lea.smem [#allocation11], 5
        %260 = sst [smem:[%s259]] 2
        %s261 = scalar_lea.smem [#allocation11], 6
        %262 = sst [smem:[%s261]] 256
        %s263 = scalar_lea.smem [#allocation11], 7
        %264 = sst [smem:[%s263]] 64
        %s265 = scalar_lea.smem [#allocation11], 8
        %266 = sst [smem:[%s265]] 4
        %268 = dma.general %s233, 65536, %s247, [#allocation3], [#allocation10], [#allocation11], %s245, 0
        %v269 = vld [vmem:[#allocation4] sm:$0xf]
        %v270 = vld [vmem:[%s0] sm:$0xff]
        %v271 = vld [vmem:[%s0 + $0x8] sm:$0xff]
        %v272 = vld [vmem:[%s0 + $0x10] sm:$0xff]
        %v273 = vld [vmem:[%s0 + $0x18] sm:$0xff]
        %v274 = vld [vmem:[%s0 + $0x20] sm:$0xff]
        %v275 = vld [vmem:[%s0 + $0x28] sm:$0xff]
        %v276 = vld [vmem:[%s0 + $0x30] sm:$0xff]
        %v277 = vld [vmem:[%s0 + $0x38] sm:$0xff]
        %v278 = vld [vmem:[%s0 + $0x40] sm:$0x33]
        %v279 = vld [vmem:[%s0 + $0x48] sm:$0x33]
        %v280 = vld [vmem:[%s2] sm:$0xff]
        %282 = vset.pattern.permute.xlu0 0
        %283 = vperm.xlu0 %282, %v280
        %v284 = vpop.permute.xlu0 %283
        %v296 = vunpack.c.l.b16 %v270
        %v297 = vunpack.c.h.b16 %v270
        %v298 = vunpack.c.l.b16 %v271
        %v299 = vunpack.c.h.b16 %v271
        %v300 = vunpack.c.l.b16 %v272
        %v301 = vunpack.c.h.b16 %v272
        %v302 = vunpack.c.l.b16 %v273
        %v303 = vunpack.c.h.b16 %v273
        %v304 = vunpack.c.l.b16 %v274
        %v305 = vunpack.c.h.b16 %v274
        %v306 = vunpack.c.l.b16 %v275
        %v307 = vunpack.c.h.b16 %v275
        %v308 = vunpack.c.l.b16 %v276
        %v309 = vunpack.c.h.b16 %v276
        %v310 = vunpack.c.l.b16 %v277
        %v311 = vunpack.c.h.b16 %v277
        %v312 = vunpack.c.l.b16 %v278
        %v313 = vunpack.c.h.b16 %v278
        %v314 = vunpack.c.l.b16 %v279
        %v315 = vunpack.c.h.b16 %v279
        %v316 = vpack.c.b16 %v300, %v296
        %v317 = vpack.c.b16 %v301, %v297
        %v318 = vpack.c.b16 %v302, %v298
        %v319 = vpack.c.b16 %v303, %v299
        %v320 = vpack.c.b16 %v308, %v304
        %v321 = vpack.c.b16 %v309, %v305
        %v322 = vpack.c.b16 %v310, %v306
        %v323 = vpack.c.b16 %v311, %v307
        %v324 = vpack.c.b16 %v312, %v312
        %v325 = vpack.c.b16 %v313, %v313
        %v326 = vpack.c.b16 %v314, %v314
        %v327 = vpack.c.b16 %v315, %v315
        %vm336 = vcmask 293888
        %v338 = vsel %vm336, %v269, 0
        %vm340 = vcmask 1041408
        %v342 = vsel %vm340, %v324, 0
        %v345 = vsel %vm340, %v325, 0
        %v348 = vsel %vm340, %v326, 0
        %v351 = vsel %vm340, %v327, 0
        %353 = vmatprep.subr.bf16.mxu0 %v317
        %354 = vmatpush1.bf16.msra.mxu0 %v316
        %355 = vmatprep.subr.bf16.mxu0 %v321
        %356 = vmatpush1.bf16.msra.mxu0 %v320
        %357 = vmatprep.subr.bf16.mxu0 %v345
        %358 = vmatpush1.bf16.msra.mxu0 %v342
        %359 = vmatprep.subr.bf16.mxu0 0
        %360 = vmatpush1.bf16.msra.mxu0 0
        %361 = vmatprep.subr.bf16.mxu0 0
        %362 = vmatpush1.bf16.msra.mxu0 0
        %363 = vmatprep.subr.bf16.mxu0 0
        %364 = vmatpush1.bf16.msra.mxu0 0
        %365 = vmatprep.subr.bf16.mxu0 0
        %366 = vmatpush1.bf16.msra.mxu0 0
        %367 = vmatprep.subr.bf16.mxu0 0
        %368 = vmatpush1.bf16.msra.mxu0 0
        %369 = vmatprep.subr.bf16.mxu0 0
        %370 = vmatpush1.bf16.msra.mxu0 0
        %371 = vmatprep.subr.bf16.mxu0 0
        %372 = vmatpush1.bf16.msra.mxu0 0
        %373 = vmatprep.subr.bf16.mxu0 0
        %374 = vmatpush1.bf16.msra.mxu0 0
        %375 = vmatprep.subr.bf16.mxu0 0
        %376 = vmatpush1.bf16.msra.mxu0 0
        %377 = vmatprep.subr.bf16.mxu0 0
        %378 = vmatpush1.bf16.msra.mxu0 0
        %379 = vmatprep.subr.bf16.mxu0 0
        %380 = vmatpush1.bf16.msra.mxu0 0
        %381 = vmatprep.subr.bf16.mxu0 0
        %382 = vmatpush1.bf16.msra.mxu0 0
        %383 = vmatprep.subr.bf16.mxu0 0
        %384 = vmatpush1.bf16.msra.mxu0 0
        %385 = vmatprep.mubr.bf16.mxu0 0
        %386 = vmatmul.mubr.bf16.gmra.mrb[0].mxu0 %v338
        %v387 = vpop.f32.mrb[0].mxu0
        %v388 = vadd.f32 %v284, %v387
        %v389 = vpop.f32.mrb[0].mxu0
        %v390 = vadd.f32 %v284, %v389
        %v391 = vpop.f32.mrb[0].mxu0
        %v392 = vpop.f32.mrb[0].mxu0
        %393 = vdwg.mxu0
        %394 = vmatprep.subr.bf16.mxu0 %v319
        %395 = vmatpush1.bf16.msra.mxu0 %v318
        %396 = vmatprep.subr.bf16.mxu0 %v323
        %397 = vmatpush1.bf16.msra.mxu0 %v322
        %398 = vmatprep.subr.bf16.mxu0 %v351
        %399 = vmatpush1.bf16.msra.mxu0 %v348
        %400 = vmatprep.subr.bf16.mxu0 0
        %401 = vmatpush1.bf16.msra.mxu0 0
        %402 = vmatprep.subr.bf16.mxu0 0
        %403 = vmatpush1.bf16.msra.mxu0 0
        %404 = vmatprep.subr.bf16.mxu0 0
        %405 = vmatpush1.bf16.msra.mxu0 0
        %406 = vmatprep.subr.bf16.mxu0 0
        %407 = vmatpush1.bf16.msra.mxu0 0
        %408 = vmatprep.subr.bf16.mxu0 0
        %409 = vmatpush1.bf16.msra.mxu0 0
        %410 = vmatprep.subr.bf16.mxu0 0
        %411 = vmatpush1.bf16.msra.mxu0 0
        %412 = vmatprep.subr.bf16.mxu0 0
        %413 = vmatpush1.bf16.msra.mxu0 0
        %414 = vmatprep.subr.bf16.mxu0 0
        %415 = vmatpush1.bf16.msra.mxu0 0
        %416 = vmatprep.subr.bf16.mxu0 0
        %417 = vmatpush1.bf16.msra.mxu0 0
        %418 = vmatprep.subr.bf16.mxu0 0
        %419 = vmatpush1.bf16.msra.mxu0 0
        %420 = vmatprep.subr.bf16.mxu0 0
        %421 = vmatpush1.bf16.msra.mxu0 0
        %422 = vmatprep.subr.bf16.mxu0 0
        %423 = vmatpush1.bf16.msra.mxu0 0
        %424 = vmatprep.subr.bf16.mxu0 0
        %425 = vmatpush1.bf16.msra.mxu0 0
        %426 = vmatprep.mubr.bf16.mxu0 0
        %427 = vmatmul.mubr.bf16.gmra.mrb[0].mxu0 %v338
        %v428 = vpop.f32.mrb[0].mxu0
        %v429 = vadd.f32 %v284, %v428
        %v430 = vpop.f32.mrb[0].mxu0
        %v431 = vadd.f32 %v284, %v430
        %v432 = vpop.f32.mrb[0].mxu0
        %v433 = vpop.f32.mrb[0].mxu0
        %434 = vdwg.mxu0
        %v435 = vmax.f32 %v388, 0.0
        %v436 = vmax.f32 %v390, 0.0
        %v437 = vmax.f32 %v429, 0.0
        %v438 = vmax.f32 %v431, 0.0
        %v441 = vrot.slane %v435, 1
        %v442 = vrot.slane %v436, 1
        %v445 = vrot.slane %v435, 2
        %v446 = vrot.slane %v436, 2
        %v449 = vrot.slane %v435, 3
        %v450 = vrot.slane %v436, 3
        %v453 = vrot.slane %v435, 4
        %v454 = vrot.slane %v436, 4
        %v457 = vrot.slane %v435, 5
        %v458 = vrot.slane %v436, 5
        %v461 = vrot.slane %v435, 6
        %v462 = vrot.slane %v436, 6
        %v465 = vrot.slane %v435, 7
        %v466 = vrot.slane %v436, 7
        %v471 = vrot.slane %v437, 1
        %v472 = vrot.slane %v438, 1
        %v473 = vrot.slane %v437, 2
        %v474 = vrot.slane %v438, 2
        %v475 = vrot.slane %v437, 3
        %v476 = vrot.slane %v438, 3
        %v477 = vrot.slane %v437, 4
        %v478 = vrot.slane %v438, 4
        %v479 = vrot.slane %v437, 5
        %v480 = vrot.slane %v438, 5
        %v481 = vrot.slane %v437, 6
        %v482 = vrot.slane %v438, 6
        %v483 = vrot.slane %v437, 7
        %v484 = vrot.slane %v438, 7
        %v485 = vrot.slane %v471, 7
        %v486 = vrot.slane %v472, 7
        %v487 = vrot.slane %v473, 7
        %v488 = vrot.slane %v474, 7
        %v489 = vrot.slane %v475, 7
        %v490 = vrot.slane %v476, 7
        %v491 = vrot.slane %v477, 7
        %v492 = vrot.slane %v478, 7
        %v493 = vrot.slane %v479, 7
        %v494 = vrot.slane %v480, 7
        %v495 = vrot.slane %v481, 7
        %v496 = vrot.slane %v482, 7
        %v497 = vrot.slane %v483, 7
        %v498 = vrot.slane %v484, 7
        %vm515 = vcmask 1040384
        %v516 = vsel %vm515, %v435, %v483
        %v517 = vsel %vm515, %v436, %v484
        %v518 = vsel %vm515, %v441, %v485
        %v519 = vsel %vm515, %v442, %v486
        %v520 = vsel %vm515, %v445, %v487
        %v521 = vsel %vm515, %v446, %v488
        %v522 = vsel %vm515, %v449, %v489
        %v523 = vsel %vm515, %v450, %v490
        %v524 = vsel %vm515, %v453, %v491
        %v525 = vsel %vm515, %v454, %v492
        %v526 = vsel %vm515, %v457, %v493
        %v527 = vsel %vm515, %v458, %v494
        %v528 = vsel %vm515, %v461, %v495
        %v529 = vsel %vm515, %v462, %v496
        %v530 = vsel %vm515, %v465, %v497
        %v531 = vsel %vm515, %v466, %v498
        %v532 = vpack.c.bf16 %v516, %v516
        %v533 = vpack.c.bf16 %v517, %v517
        %v534 = vpack.c.bf16 %v518, %v518
        %v535 = vpack.c.bf16 %v519, %v519
        %v536 = vpack.c.bf16 %v520, %v520
        %v537 = vpack.c.bf16 %v521, %v521
        %v538 = vpack.c.bf16 %v522, %v522
        %v539 = vpack.c.bf16 %v523, %v523
        %v540 = vpack.c.bf16 %v524, %v524
        %v541 = vpack.c.bf16 %v525, %v525
        %v542 = vpack.c.bf16 %v526, %v526
        %v543 = vpack.c.bf16 %v527, %v527
        %v544 = vpack.c.bf16 %v528, %v528
        %v545 = vpack.c.bf16 %v529, %v529
        %v546 = vpack.c.bf16 %v530, %v530
        %v547 = vpack.c.bf16 %v531, %v531
        %s548 = smul.u32 4, 256
        %s549 = smul.u32 %s548, 4
        %s550 = sshll.u32 %s549, 4
        %551 = dma.done [#allocation3], %s550
        %v552 = vld [vmem:[#allocation2] sm:$0xff]
        %v553 = vld [vmem:[#allocation2 + $0x8] sm:$0xff]
        %v554 = vld [vmem:[#allocation2 + $0x10] sm:$0xff]
        %v555 = vld [vmem:[#allocation2 + $0x18] sm:$0xff]
        %v556 = vld [vmem:[#allocation2 + $0x20] sm:$0xff]
        %v557 = vld [vmem:[#allocation2 + $0x28] sm:$0xff]
        %v558 = vld [vmem:[#allocation2 + $0x30] sm:$0xff]
        %v559 = vld [vmem:[#allocation2 + $0x38] sm:$0xff]
        %v560 = vld [vmem:[#allocation2 + $0x40] sm:$0xff]
        %v561 = vld [vmem:[#allocation2 + $0x48] sm:$0xff]
        %v562 = vld [vmem:[#allocation2 + $0x50] sm:$0xff]
        %v563 = vld [vmem:[#allocation2 + $0x58] sm:$0xff]
        %v564 = vld [vmem:[#allocation2 + $0x60] sm:$0xff]
        %v565 = vld [vmem:[#allocation2 + $0x68] sm:$0xff]
        %v566 = vld [vmem:[#allocation2 + $0x70] sm:$0xff]
        %v567 = vld [vmem:[#allocation2 + $0x78] sm:$0xff]
        %v568 = vld [vmem:[#allocation2 + $0x80] sm:$0xff]
        %v569 = vld [vmem:[#allocation2 + $0x88] sm:$0xff]
        %v570 = vld [vmem:[#allocation2 + $0x90] sm:$0xff]
        %v571 = vld [vmem:[#allocation2 + $0x98] sm:$0xff]
        %v572 = vld [vmem:[#allocation2 + $0xa0] sm:$0xff]
        %v573 = vld [vmem:[#allocation2 + $0xa8] sm:$0xff]
        %v574 = vld [vmem:[#allocation2 + $0xb0] sm:$0xff]
        %v575 = vld [vmem:[#allocation2 + $0xb8] sm:$0xff]
        %v576 = vld [vmem:[#allocation2 + $0xc0] sm:$0xff]
        %v577 = vld [vmem:[#allocation2 + $0xc8] sm:$0xff]
        %v578 = vld [vmem:[#allocation2 + $0xd0] sm:$0xff]
        %v579 = vld [vmem:[#allocation2 + $0xd8] sm:$0xff]
        %v580 = vld [vmem:[#allocation2 + $0xe0] sm:$0xff]
        %v581 = vld [vmem:[#allocation2 + $0xe8] sm:$0xff]
        %v582 = vld [vmem:[#allocation2 + $0xf0] sm:$0xff]
        %v583 = vld [vmem:[#allocation2 + $0xf8] sm:$0xff]
        %v584 = vld [vmem:[#allocation2 + $0x100] sm:$0xff]
        %v585 = vld [vmem:[#allocation2 + $0x108] sm:$0xff]
        %v586 = vld [vmem:[#allocation2 + $0x110] sm:$0xff]
        %v587 = vld [vmem:[#allocation2 + $0x118] sm:$0xff]
        %v588 = vld [vmem:[#allocation2 + $0x120] sm:$0xff]
        %v589 = vld [vmem:[#allocation2 + $0x128] sm:$0xff]
        %v590 = vld [vmem:[#allocation2 + $0x130] sm:$0xff]
        %v591 = vld [vmem:[#allocation2 + $0x138] sm:$0xff]
        %v592 = vld [vmem:[#allocation2 + $0x140] sm:$0xff]
        %v593 = vld [vmem:[#allocation2 + $0x148] sm:$0xff]
        %v594 = vld [vmem:[#allocation2 + $0x150] sm:$0xff]
        %v595 = vld [vmem:[#allocation2 + $0x158] sm:$0xff]
        %v596 = vld [vmem:[#allocation2 + $0x160] sm:$0xff]
        %v597 = vld [vmem:[#allocation2 + $0x168] sm:$0xff]
        %v598 = vld [vmem:[#allocation2 + $0x170] sm:$0xff]
        %v599 = vld [vmem:[#allocation2 + $0x178] sm:$0xff]
        %v600 = vld [vmem:[#allocation2 + $0x180] sm:$0xff]
        %v601 = vld [vmem:[#allocation2 + $0x188] sm:$0xff]
        %v602 = vld [vmem:[#allocation2 + $0x190] sm:$0xff]
        %v603 = vld [vmem:[#allocation2 + $0x198] sm:$0xff]
        %v604 = vld [vmem:[#allocation2 + $0x1a0] sm:$0xff]
        %v605 = vld [vmem:[#allocation2 + $0x1a8] sm:$0xff]
        %v606 = vld [vmem:[#allocation2 + $0x1b0] sm:$0xff]
        %v607 = vld [vmem:[#allocation2 + $0x1b8] sm:$0xff]
        %v608 = vld [vmem:[#allocation2 + $0x1c0] sm:$0xff]
        %v609 = vld [vmem:[#allocation2 + $0x1c8] sm:$0xff]
        %v610 = vld [vmem:[#allocation2 + $0x1d0] sm:$0xff]
        %v611 = vld [vmem:[#allocation2 + $0x1d8] sm:$0xff]
        %v612 = vld [vmem:[#allocation2 + $0x1e0] sm:$0xff]
        %v613 = vld [vmem:[#allocation2 + $0x1e8] sm:$0xff]
        %v614 = vld [vmem:[#allocation2 + $0x1f0] sm:$0xff]
        %v615 = vld [vmem:[#allocation2 + $0x1f8] sm:$0xff]
        %v616 = vld [vmem:[#allocation2 + $0x200] sm:$0xff]
        %v617 = vld [vmem:[#allocation2 + $0x208] sm:$0xff]
        %v618 = vld [vmem:[#allocation2 + $0x210] sm:$0xff]
        %v619 = vld [vmem:[#allocation2 + $0x218] sm:$0xff]
        %v620 = vld [vmem:[#allocation2 + $0x220] sm:$0xff]
        %v621 = vld [vmem:[#allocation2 + $0x228] sm:$0xff]
        %v622 = vld [vmem:[#allocation2 + $0x230] sm:$0xff]
        %v623 = vld [vmem:[#allocation2 + $0x238] sm:$0xff]
        %v624 = vld [vmem:[#allocation2 + $0x240] sm:$0xff]
        %v625 = vld [vmem:[#allocation2 + $0x248] sm:$0xff]
        %v626 = vld [vmem:[#allocation2 + $0x250] sm:$0xff]
        %v627 = vld [vmem:[#allocation2 + $0x258] sm:$0xff]
        %v628 = vld [vmem:[#allocation2 + $0x260] sm:$0xff]
        %v629 = vld [vmem:[#allocation2 + $0x268] sm:$0xff]
        %v630 = vld [vmem:[#allocation2 + $0x270] sm:$0xff]
        %v631 = vld [vmem:[#allocation2 + $0x278] sm:$0xff]
        %v632 = vld [vmem:[#allocation2 + $0x280] sm:$0xff]
        %v633 = vld [vmem:[#allocation2 + $0x288] sm:$0xff]
        %v634 = vld [vmem:[#allocation2 + $0x290] sm:$0xff]
        %v635 = vld [vmem:[#allocation2 + $0x298] sm:$0xff]
        %v636 = vld [vmem:[#allocation2 + $0x2a0] sm:$0xff]
        %v637 = vld [vmem:[#allocation2 + $0x2a8] sm:$0xff]
        %v638 = vld [vmem:[#allocation2 + $0x2b0] sm:$0xff]
        %v639 = vld [vmem:[#allocation2 + $0x2b8] sm:$0xff]
        %v640 = vld [vmem:[#allocation2 + $0x2c0] sm:$0xff]
        %v641 = vld [vmem:[#allocation2 + $0x2c8] sm:$0xff]
        %v642 = vld [vmem:[#allocation2 + $0x2d0] sm:$0xff]
        %v643 = vld [vmem:[#allocation2 + $0x2d8] sm:$0xff]
        %v644 = vld [vmem:[#allocation2 + $0x2e0] sm:$0xff]
        %v645 = vld [vmem:[#allocation2 + $0x2e8] sm:$0xff]
        %v646 = vld [vmem:[#allocation2 + $0x2f0] sm:$0xff]
        %v647 = vld [vmem:[#allocation2 + $0x2f8] sm:$0xff]
        %v648 = vld [vmem:[#allocation2 + $0x300] sm:$0xff]
        %v649 = vld [vmem:[#allocation2 + $0x308] sm:$0xff]
        %v650 = vld [vmem:[#allocation2 + $0x310] sm:$0xff]
        %v651 = vld [vmem:[#allocation2 + $0x318] sm:$0xff]
        %v652 = vld [vmem:[#allocation2 + $0x320] sm:$0xff]
        %v653 = vld [vmem:[#allocation2 + $0x328] sm:$0xff]
        %v654 = vld [vmem:[#allocation2 + $0x330] sm:$0xff]
        %v655 = vld [vmem:[#allocation2 + $0x338] sm:$0xff]
        %v656 = vld [vmem:[#allocation2 + $0x340] sm:$0xff]
        %v657 = vld [vmem:[#allocation2 + $0x348] sm:$0xff]
        %v658 = vld [vmem:[#allocation2 + $0x350] sm:$0xff]
        %v659 = vld [vmem:[#allocation2 + $0x358] sm:$0xff]
        %v660 = vld [vmem:[#allocation2 + $0x360] sm:$0xff]
        %v661 = vld [vmem:[#allocation2 + $0x368] sm:$0xff]
        %v662 = vld [vmem:[#allocation2 + $0x370] sm:$0xff]
        %v663 = vld [vmem:[#allocation2 + $0x378] sm:$0xff]
        %v664 = vld [vmem:[#allocation2 + $0x380] sm:$0xff]
        %v665 = vld [vmem:[#allocation2 + $0x388] sm:$0xff]
        %v666 = vld [vmem:[#allocation2 + $0x390] sm:$0xff]
        %v667 = vld [vmem:[#allocation2 + $0x398] sm:$0xff]
        %v668 = vld [vmem:[#allocation2 + $0x3a0] sm:$0xff]
        %v669 = vld [vmem:[#allocation2 + $0x3a8] sm:$0xff]
        %v670 = vld [vmem:[#allocation2 + $0x3b0] sm:$0xff]
        %v671 = vld [vmem:[#allocation2 + $0x3b8] sm:$0xff]
        %v672 = vld [vmem:[#allocation2 + $0x3c0] sm:$0xff]
        %v673 = vld [vmem:[#allocation2 + $0x3c8] sm:$0xff]
        %v674 = vld [vmem:[#allocation2 + $0x3d0] sm:$0xff]
        %v675 = vld [vmem:[#allocation2 + $0x3d8] sm:$0xff]
        %v676 = vld [vmem:[#allocation2 + $0x3e0] sm:$0xff]
        %v677 = vld [vmem:[#allocation2 + $0x3e8] sm:$0xff]
        %v678 = vld [vmem:[#allocation2 + $0x3f0] sm:$0xff]
        %v679 = vld [vmem:[#allocation2 + $0x3f8] sm:$0xff]
        %v680 = vld [vmem:[#allocation2 + $0x400] sm:$0xff]
        %v681 = vld [vmem:[#allocation2 + $0x408] sm:$0xff]
        %v682 = vld [vmem:[#allocation2 + $0x410] sm:$0xff]
        %v683 = vld [vmem:[#allocation2 + $0x418] sm:$0xff]
        %v684 = vld [vmem:[#allocation2 + $0x420] sm:$0xff]
        %v685 = vld [vmem:[#allocation2 + $0x428] sm:$0xff]
        %v686 = vld [vmem:[#allocation2 + $0x430] sm:$0xff]
        %v687 = vld [vmem:[#allocation2 + $0x438] sm:$0xff]
        %v688 = vld [vmem:[#allocation2 + $0x440] sm:$0xff]
        %v689 = vld [vmem:[#allocation2 + $0x448] sm:$0xff]
        %v690 = vld [vmem:[#allocation2 + $0x450] sm:$0xff]
        %v691 = vld [vmem:[#allocation2 + $0x458] sm:$0xff]
        %v692 = vld [vmem:[#allocation2 + $0x460] sm:$0xff]
        %v693 = vld [vmem:[#allocation2 + $0x468] sm:$0xff]
        %v694 = vld [vmem:[#allocation2 + $0x470] sm:$0xff]
        %v695 = vld [vmem:[#allocation2 + $0x478] sm:$0xff]
        %v696 = vld [vmem:[#allocation2 + $0x480] sm:$0xff]
        %v697 = vld [vmem:[#allocation2 + $0x488] sm:$0xff]
        %v698 = vld [vmem:[#allocation2 + $0x490] sm:$0xff]
        %v699 = vld [vmem:[#allocation2 + $0x498] sm:$0xff]
        %v700 = vld [vmem:[#allocation2 + $0x4a0] sm:$0xff]
        %v701 = vld [vmem:[#allocation2 + $0x4a8] sm:$0xff]
        %v702 = vld [vmem:[#allocation2 + $0x4b0] sm:$0xff]
        %v703 = vld [vmem:[#allocation2 + $0x4b8] sm:$0xff]
        %v704 = vld [vmem:[#allocation2 + $0x4c0] sm:$0xff]
        %v705 = vld [vmem:[#allocation2 + $0x4c8] sm:$0xff]
        %v706 = vld [vmem:[#allocation2 + $0x4d0] sm:$0xff]
        %v707 = vld [vmem:[#allocation2 + $0x4d8] sm:$0xff]
        %v708 = vld [vmem:[#allocation2 + $0x4e0] sm:$0xff]
        %v709 = vld [vmem:[#allocation2 + $0x4e8] sm:$0xff]
        %v710 = vld [vmem:[#allocation2 + $0x4f0] sm:$0xff]
        %v711 = vld [vmem:[#allocation2 + $0x4f8] sm:$0xff]
        %v712 = vld [vmem:[#allocation2 + $0x500] sm:$0xff]
        %v713 = vld [vmem:[#allocation2 + $0x508] sm:$0xff]
        %v714 = vld [vmem:[#allocation2 + $0x510] sm:$0xff]
        %v715 = vld [vmem:[#allocation2 + $0x518] sm:$0xff]
        %v716 = vld [vmem:[#allocation2 + $0x520] sm:$0xff]
        %v717 = vld [vmem:[#allocation2 + $0x528] sm:$0xff]
        %v718 = vld [vmem:[#allocation2 + $0x530] sm:$0xff]
        %v719 = vld [vmem:[#allocation2 + $0x538] sm:$0xff]
        %v720 = vld [vmem:[#allocation2 + $0x540] sm:$0xff]
        %v721 = vld [vmem:[#allocation2 + $0x548] sm:$0xff]
        %v722 = vld [vmem:[#allocation2 + $0x550] sm:$0xff]
        %v723 = vld [vmem:[#allocation2 + $0x558] sm:$0xff]
        %v724 = vld [vmem:[#allocation2 + $0x560] sm:$0xff]
        %v725 = vld [vmem:[#allocation2 + $0x568] sm:$0xff]
        %v726 = vld [vmem:[#allocation2 + $0x570] sm:$0xff]
        %v727 = vld [vmem:[#allocation2 + $0x578] sm:$0xff]
        %v728 = vld [vmem:[#allocation2 + $0x580] sm:$0xff]
        %v729 = vld [vmem:[#allocation2 + $0x588] sm:$0xff]
        %v730 = vld [vmem:[#allocation2 + $0x590] sm:$0xff]
        %v731 = vld [vmem:[#allocation2 + $0x598] sm:$0xff]
        %v732 = vld [vmem:[#allocation2 + $0x5a0] sm:$0xff]
        %v733 = vld [vmem:[#allocation2 + $0x5a8] sm:$0xff]
        %v734 = vld [vmem:[#allocation2 + $0x5b0] sm:$0xff]
        %v735 = vld [vmem:[#allocation2 + $0x5b8] sm:$0xff]
        %v736 = vld [vmem:[#allocation2 + $0x5c0] sm:$0xff]
        %v737 = vld [vmem:[#allocation2 + $0x5c8] sm:$0xff]
        %v738 = vld [vmem:[#allocation2 + $0x5d0] sm:$0xff]
        %v739 = vld [vmem:[#allocation2 + $0x5d8] sm:$0xff]
        %v740 = vld [vmem:[#allocation2 + $0x5e0] sm:$0xff]
        %v741 = vld [vmem:[#allocation2 + $0x5e8] sm:$0xff]
        %v742 = vld [vmem:[#allocation2 + $0x5f0] sm:$0xff]
        %v743 = vld [vmem:[#allocation2 + $0x5f8] sm:$0xff]
        %v744 = vld [vmem:[#allocation2 + $0x600] sm:$0xff]
        %v745 = vld [vmem:[#allocation2 + $0x608] sm:$0xff]
        %v746 = vld [vmem:[#allocation2 + $0x610] sm:$0xff]
        %v747 = vld [vmem:[#allocation2 + $0x618] sm:$0xff]
        %v748 = vld [vmem:[#allocation2 + $0x620] sm:$0xff]
        %v749 = vld [vmem:[#allocation2 + $0x628] sm:$0xff]
        %v750 = vld [vmem:[#allocation2 + $0x630] sm:$0xff]
        %v751 = vld [vmem:[#allocation2 + $0x638] sm:$0xff]
        %v752 = vld [vmem:[#allocation2 + $0x640] sm:$0xff]
        %v753 = vld [vmem:[#allocation2 + $0x648] sm:$0xff]
        %v754 = vld [vmem:[#allocation2 + $0x650] sm:$0xff]
        %v755 = vld [vmem:[#allocation2 + $0x658] sm:$0xff]
        %v756 = vld [vmem:[#allocation2 + $0x660] sm:$0xff]
        %v757 = vld [vmem:[#allocation2 + $0x668] sm:$0xff]
        %v758 = vld [vmem:[#allocation2 + $0x670] sm:$0xff]
        %v759 = vld [vmem:[#allocation2 + $0x678] sm:$0xff]
        %v760 = vld [vmem:[#allocation2 + $0x680] sm:$0xff]
        %v761 = vld [vmem:[#allocation2 + $0x688] sm:$0xff]
        %v762 = vld [vmem:[#allocation2 + $0x690] sm:$0xff]
        %v763 = vld [vmem:[#allocation2 + $0x698] sm:$0xff]
        %v764 = vld [vmem:[#allocation2 + $0x6a0] sm:$0xff]
        %v765 = vld [vmem:[#allocation2 + $0x6a8] sm:$0xff]
        %v766 = vld [vmem:[#allocation2 + $0x6b0] sm:$0xff]
        %v767 = vld [vmem:[#allocation2 + $0x6b8] sm:$0xff]
        %v768 = vld [vmem:[#allocation2 + $0x6c0] sm:$0xff]
        %v769 = vld [vmem:[#allocation2 + $0x6c8] sm:$0xff]
        %v770 = vld [vmem:[#allocation2 + $0x6d0] sm:$0xff]
        %v771 = vld [vmem:[#allocation2 + $0x6d8] sm:$0xff]
        %v772 = vld [vmem:[#allocation2 + $0x6e0] sm:$0xff]
        %v773 = vld [vmem:[#allocation2 + $0x6e8] sm:$0xff]
        %v774 = vld [vmem:[#allocation2 + $0x6f0] sm:$0xff]
        %v775 = vld [vmem:[#allocation2 + $0x6f8] sm:$0xff]
        %v776 = vld [vmem:[#allocation2 + $0x700] sm:$0xff]
        %v777 = vld [vmem:[#allocation2 + $0x708] sm:$0xff]
        %v778 = vld [vmem:[#allocation2 + $0x710] sm:$0xff]
        %v779 = vld [vmem:[#allocation2 + $0x718] sm:$0xff]
        %v780 = vld [vmem:[#allocation2 + $0x720] sm:$0xff]
        %v781 = vld [vmem:[#allocation2 + $0x728] sm:$0xff]
        %v782 = vld [vmem:[#allocation2 + $0x730] sm:$0xff]
        %v783 = vld [vmem:[#allocation2 + $0x738] sm:$0xff]
        %v784 = vld [vmem:[#allocation2 + $0x740] sm:$0xff]
        %v785 = vld [vmem:[#allocation2 + $0x748] sm:$0xff]
        %v786 = vld [vmem:[#allocation2 + $0x750] sm:$0xff]
        %v787 = vld [vmem:[#allocation2 + $0x758] sm:$0xff]
        %v788 = vld [vmem:[#allocation2 + $0x760] sm:$0xff]
        %v789 = vld [vmem:[#allocation2 + $0x768] sm:$0xff]
        %v790 = vld [vmem:[#allocation2 + $0x770] sm:$0xff]
        %v791 = vld [vmem:[#allocation2 + $0x778] sm:$0xff]
        %v792 = vld [vmem:[#allocation2 + $0x780] sm:$0xff]
        %v793 = vld [vmem:[#allocation2 + $0x788] sm:$0xff]
        %v794 = vld [vmem:[#allocation2 + $0x790] sm:$0xff]
        %v795 = vld [vmem:[#allocation2 + $0x798] sm:$0xff]
        %v796 = vld [vmem:[#allocation2 + $0x7a0] sm:$0xff]
        %v797 = vld [vmem:[#allocation2 + $0x7a8] sm:$0xff]
        %v798 = vld [vmem:[#allocation2 + $0x7b0] sm:$0xff]
        %v799 = vld [vmem:[#allocation2 + $0x7b8] sm:$0xff]
        %v800 = vld [vmem:[#allocation2 + $0x7c0] sm:$0xff]
        %v801 = vld [vmem:[#allocation2 + $0x7c8] sm:$0xff]
        %v802 = vld [vmem:[#allocation2 + $0x7d0] sm:$0xff]
        %v803 = vld [vmem:[#allocation2 + $0x7d8] sm:$0xff]
        %v804 = vld [vmem:[#allocation2 + $0x7e0] sm:$0xff]
        %v805 = vld [vmem:[#allocation2 + $0x7e8] sm:$0xff]
        %v806 = vld [vmem:[#allocation2 + $0x7f0] sm:$0xff]
        %v807 = vld [vmem:[#allocation2 + $0x7f8] sm:$0xff]
        %v808 = vld [vmem:[#allocation2 + $0x800] sm:$0xff]
        %v809 = vld [vmem:[#allocation2 + $0x808] sm:$0xff]
        %v810 = vld [vmem:[#allocation2 + $0x810] sm:$0xff]
        %v811 = vld [vmem:[#allocation2 + $0x818] sm:$0xff]
        %v812 = vld [vmem:[#allocation2 + $0x820] sm:$0xff]
        %v813 = vld [vmem:[#allocation2 + $0x828] sm:$0xff]
        %v814 = vld [vmem:[#allocation2 + $0x830] sm:$0xff]
        %v815 = vld [vmem:[#allocation2 + $0x838] sm:$0xff]
        %v816 = vld [vmem:[#allocation2 + $0x840] sm:$0xff]
        %v817 = vld [vmem:[#allocation2 + $0x848] sm:$0xff]
        %v818 = vld [vmem:[#allocation2 + $0x850] sm:$0xff]
        %v819 = vld [vmem:[#allocation2 + $0x858] sm:$0xff]
        %v820 = vld [vmem:[#allocation2 + $0x860] sm:$0xff]
        %v821 = vld [vmem:[#allocation2 + $0x868] sm:$0xff]
        %v822 = vld [vmem:[#allocation2 + $0x870] sm:$0xff]
        %v823 = vld [vmem:[#allocation2 + $0x878] sm:$0xff]
        %v824 = vld [vmem:[#allocation2 + $0x880] sm:$0xff]
        %v825 = vld [vmem:[#allocation2 + $0x888] sm:$0xff]
        %v826 = vld [vmem:[#allocation2 + $0x890] sm:$0xff]
        %v827 = vld [vmem:[#allocation2 + $0x898] sm:$0xff]
        %v828 = vld [vmem:[#allocation2 + $0x8a0] sm:$0xff]
        %v829 = vld [vmem:[#allocation2 + $0x8a8] sm:$0xff]
        %v830 = vld [vmem:[#allocation2 + $0x8b0] sm:$0xff]
        %v831 = vld [vmem:[#allocation2 + $0x8b8] sm:$0xff]
        %v832 = vld [vmem:[#allocation2 + $0x8c0] sm:$0xff]
        %v833 = vld [vmem:[#allocation2 + $0x8c8] sm:$0xff]
        %v834 = vld [vmem:[#allocation2 + $0x8d0] sm:$0xff]
        %v835 = vld [vmem:[#allocation2 + $0x8d8] sm:$0xff]
        %v836 = vld [vmem:[#allocation2 + $0x8e0] sm:$0xff]
        %v837 = vld [vmem:[#allocation2 + $0x8e8] sm:$0xff]
        %v838 = vld [vmem:[#allocation2 + $0x8f0] sm:$0xff]
        %v839 = vld [vmem:[#allocation2 + $0x8f8] sm:$0xff]
        %v840 = vld [vmem:[#allocation2 + $0x900] sm:$0xff]
        %v841 = vld [vmem:[#allocation2 + $0x908] sm:$0xff]
        %v842 = vld [vmem:[#allocation2 + $0x910] sm:$0xff]
        %v843 = vld [vmem:[#allocation2 + $0x918] sm:$0xff]
        %v844 = vld [vmem:[#allocation2 + $0x920] sm:$0xff]
        %v845 = vld [vmem:[#allocation2 + $0x928] sm:$0xff]
        %v846 = vld [vmem:[#allocation2 + $0x930] sm:$0xff]
        %v847 = vld [vmem:[#allocation2 + $0x938] sm:$0xff]
        %v848 = vld [vmem:[#allocation2 + $0x940] sm:$0xff]
        %v849 = vld [vmem:[#allocation2 + $0x948] sm:$0xff]
        %v850 = vld [vmem:[#allocation2 + $0x950] sm:$0xff]
        %v851 = vld [vmem:[#allocation2 + $0x958] sm:$0xff]
        %v852 = vld [vmem:[#allocation2 + $0x960] sm:$0xff]
        %v853 = vld [vmem:[#allocation2 + $0x968] sm:$0xff]
        %v854 = vld [vmem:[#allocation2 + $0x970] sm:$0xff]
        %v855 = vld [vmem:[#allocation2 + $0x978] sm:$0xff]
        %v856 = vld [vmem:[#allocation2 + $0x980] sm:$0xff]
        %v857 = vld [vmem:[#allocation2 + $0x988] sm:$0xff]
        %v858 = vld [vmem:[#allocation2 + $0x990] sm:$0xff]
        %v859 = vld [vmem:[#allocation2 + $0x998] sm:$0xff]
        %v860 = vld [vmem:[#allocation2 + $0x9a0] sm:$0xff]
        %v861 = vld [vmem:[#allocation2 + $0x9a8] sm:$0xff]
        %v862 = vld [vmem:[#allocation2 + $0x9b0] sm:$0xff]
        %v863 = vld [vmem:[#allocation2 + $0x9b8] sm:$0xff]
        %v864 = vld [vmem:[#allocation2 + $0x9c0] sm:$0xff]
        %v865 = vld [vmem:[#allocation2 + $0x9c8] sm:$0xff]
        %v866 = vld [vmem:[#allocation2 + $0x9d0] sm:$0xff]
        %v867 = vld [vmem:[#allocation2 + $0x9d8] sm:$0xff]
        %v868 = vld [vmem:[#allocation2 + $0x9e0] sm:$0xff]
        %v869 = vld [vmem:[#allocation2 + $0x9e8] sm:$0xff]
        %v870 = vld [vmem:[#allocation2 + $0x9f0] sm:$0xff]
        %v871 = vld [vmem:[#allocation2 + $0x9f8] sm:$0xff]
        %v872 = vld [vmem:[#allocation2 + $0xa00] sm:$0xff]
        %v873 = vld [vmem:[#allocation2 + $0xa08] sm:$0xff]
        %v874 = vld [vmem:[#allocation2 + $0xa10] sm:$0xff]
        %v875 = vld [vmem:[#allocation2 + $0xa18] sm:$0xff]
        %v876 = vld [vmem:[#allocation2 + $0xa20] sm:$0xff]
        %v877 = vld [vmem:[#allocation2 + $0xa28] sm:$0xff]
        %v878 = vld [vmem:[#allocation2 + $0xa30] sm:$0xff]
        %v879 = vld [vmem:[#allocation2 + $0xa38] sm:$0xff]
        %v880 = vld [vmem:[#allocation2 + $0xa40] sm:$0xff]
        %v881 = vld [vmem:[#allocation2 + $0xa48] sm:$0xff]
        %v882 = vld [vmem:[#allocation2 + $0xa50] sm:$0xff]
        %v883 = vld [vmem:[#allocation2 + $0xa58] sm:$0xff]
        %v884 = vld [vmem:[#allocation2 + $0xa60] sm:$0xff]
        %v885 = vld [vmem:[#allocation2 + $0xa68] sm:$0xff]
        %v886 = vld [vmem:[#allocation2 + $0xa70] sm:$0xff]
        %v887 = vld [vmem:[#allocation2 + $0xa78] sm:$0xff]
        %v888 = vld [vmem:[#allocation2 + $0xa80] sm:$0xff]
        %v889 = vld [vmem:[#allocation2 + $0xa88] sm:$0xff]
        %v890 = vld [vmem:[#allocation2 + $0xa90] sm:$0xff]
        %v891 = vld [vmem:[#allocation2 + $0xa98] sm:$0xff]
        %v892 = vld [vmem:[#allocation2 + $0xaa0] sm:$0xff]
        %v893 = vld [vmem:[#allocation2 + $0xaa8] sm:$0xff]
        %v894 = vld [vmem:[#allocation2 + $0xab0] sm:$0xff]
        %v895 = vld [vmem:[#allocation2 + $0xab8] sm:$0xff]
        %v896 = vld [vmem:[#allocation2 + $0xac0] sm:$0xff]
        %v897 = vld [vmem:[#allocation2 + $0xac8] sm:$0xff]
        %v898 = vld [vmem:[#allocation2 + $0xad0] sm:$0xff]
        %v899 = vld [vmem:[#allocation2 + $0xad8] sm:$0xff]
        %v900 = vld [vmem:[#allocation2 + $0xae0] sm:$0xff]
        %v901 = vld [vmem:[#allocation2 + $0xae8] sm:$0xff]
        %v902 = vld [vmem:[#allocation2 + $0xaf0] sm:$0xff]
        %v903 = vld [vmem:[#allocation2 + $0xaf8] sm:$0xff]
        %v904 = vld [vmem:[#allocation2 + $0xb00] sm:$0xff]
        %v905 = vld [vmem:[#allocation2 + $0xb08] sm:$0xff]
        %v906 = vld [vmem:[#allocation2 + $0xb10] sm:$0xff]
        %v907 = vld [vmem:[#allocation2 + $0xb18] sm:$0xff]
        %v908 = vld [vmem:[#allocation2 + $0xb20] sm:$0xff]
        %v909 = vld [vmem:[#allocation2 + $0xb28] sm:$0xff]
        %v910 = vld [vmem:[#allocation2 + $0xb30] sm:$0xff]
        %v911 = vld [vmem:[#allocation2 + $0xb38] sm:$0xff]
        %v912 = vld [vmem:[#allocation2 + $0xb40] sm:$0xff]
        %v913 = vld [vmem:[#allocation2 + $0xb48] sm:$0xff]
        %v914 = vld [vmem:[#allocation2 + $0xb50] sm:$0xff]
        %v915 = vld [vmem:[#allocation2 + $0xb58] sm:$0xff]
        %v916 = vld [vmem:[#allocation2 + $0xb60] sm:$0xff]
        %v917 = vld [vmem:[#allocation2 + $0xb68] sm:$0xff]
        %v918 = vld [vmem:[#allocation2 + $0xb70] sm:$0xff]
        %v919 = vld [vmem:[#allocation2 + $0xb78] sm:$0xff]
        %v920 = vld [vmem:[#allocation2 + $0xb80] sm:$0xff]
        %v921 = vld [vmem:[#allocation2 + $0xb88] sm:$0xff]
        %v922 = vld [vmem:[#allocation2 + $0xb90] sm:$0xff]
        %v923 = vld [vmem:[#allocation2 + $0xb98] sm:$0xff]
        %v924 = vld [vmem:[#allocation2 + $0xba0] sm:$0xff]
        %v925 = vld [vmem:[#allocation2 + $0xba8] sm:$0xff]
        %v926 = vld [vmem:[#allocation2 + $0xbb0] sm:$0xff]
        %v927 = vld [vmem:[#allocation2 + $0xbb8] sm:$0xff]
        %v928 = vld [vmem:[#allocation2 + $0xbc0] sm:$0xff]
        %v929 = vld [vmem:[#allocation2 + $0xbc8] sm:$0xff]
        %v930 = vld [vmem:[#allocation2 + $0xbd0] sm:$0xff]
        %v931 = vld [vmem:[#allocation2 + $0xbd8] sm:$0xff]
        %v932 = vld [vmem:[#allocation2 + $0xbe0] sm:$0xff]
        %v933 = vld [vmem:[#allocation2 + $0xbe8] sm:$0xff]
        %v934 = vld [vmem:[#allocation2 + $0xbf0] sm:$0xff]
        %v935 = vld [vmem:[#allocation2 + $0xbf8] sm:$0xff]
        %v936 = vld [vmem:[#allocation2 + $0xc00] sm:$0xff]
        %v937 = vld [vmem:[#allocation2 + $0xc08] sm:$0xff]
        %v938 = vld [vmem:[#allocation2 + $0xc10] sm:$0xff]
        %v939 = vld [vmem:[#allocation2 + $0xc18] sm:$0xff]
        %v940 = vld [vmem:[#allocation2 + $0xc20] sm:$0xff]
        %v941 = vld [vmem:[#allocation2 + $0xc28] sm:$0xff]
        %v942 = vld [vmem:[#allocation2 + $0xc30] sm:$0xff]
        %v943 = vld [vmem:[#allocation2 + $0xc38] sm:$0xff]
        %v944 = vld [vmem:[#allocation2 + $0xc40] sm:$0xff]
        %v945 = vld [vmem:[#allocation2 + $0xc48] sm:$0xff]
        %v946 = vld [vmem:[#allocation2 + $0xc50] sm:$0xff]
        %v947 = vld [vmem:[#allocation2 + $0xc58] sm:$0xff]
        %v948 = vld [vmem:[#allocation2 + $0xc60] sm:$0xff]
        %v949 = vld [vmem:[#allocation2 + $0xc68] sm:$0xff]
        %v950 = vld [vmem:[#allocation2 + $0xc70] sm:$0xff]
        %v951 = vld [vmem:[#allocation2 + $0xc78] sm:$0xff]
        %v952 = vld [vmem:[#allocation2 + $0xc80] sm:$0xff]
        %v953 = vld [vmem:[#allocation2 + $0xc88] sm:$0xff]
        %v954 = vld [vmem:[#allocation2 + $0xc90] sm:$0xff]
        %v955 = vld [vmem:[#allocation2 + $0xc98] sm:$0xff]
        %v956 = vld [vmem:[#allocation2 + $0xca0] sm:$0xff]
        %v957 = vld [vmem:[#allocation2 + $0xca8] sm:$0xff]
        %v958 = vld [vmem:[#allocation2 + $0xcb0] sm:$0xff]
        %v959 = vld [vmem:[#allocation2 + $0xcb8] sm:$0xff]
        %v960 = vld [vmem:[#allocation2 + $0xcc0] sm:$0xff]
        %v961 = vld [vmem:[#allocation2 + $0xcc8] sm:$0xff]
        %v962 = vld [vmem:[#allocation2 + $0xcd0] sm:$0xff]
        %v963 = vld [vmem:[#allocation2 + $0xcd8] sm:$0xff]
        %v964 = vld [vmem:[#allocation2 + $0xce0] sm:$0xff]
        %v965 = vld [vmem:[#allocation2 + $0xce8] sm:$0xff]
        %v966 = vld [vmem:[#allocation2 + $0xcf0] sm:$0xff]
        %v967 = vld [vmem:[#allocation2 + $0xcf8] sm:$0xff]
        %v968 = vld [vmem:[#allocation2 + $0xd00] sm:$0xff]
        %v969 = vld [vmem:[#allocation2 + $0xd08] sm:$0xff]
        %v970 = vld [vmem:[#allocation2 + $0xd10] sm:$0xff]
        %v971 = vld [vmem:[#allocation2 + $0xd18] sm:$0xff]
        %v972 = vld [vmem:[#allocation2 + $0xd20] sm:$0xff]
        %v973 = vld [vmem:[#allocation2 + $0xd28] sm:$0xff]
        %v974 = vld [vmem:[#allocation2 + $0xd30] sm:$0xff]
        %v975 = vld [vmem:[#allocation2 + $0xd38] sm:$0xff]
        %v976 = vld [vmem:[#allocation2 + $0xd40] sm:$0xff]
        %v977 = vld [vmem:[#allocation2 + $0xd48] sm:$0xff]
        %v978 = vld [vmem:[#allocation2 + $0xd50] sm:$0xff]
        %v979 = vld [vmem:[#allocation2 + $0xd58] sm:$0xff]
        %v980 = vld [vmem:[#allocation2 + $0xd60] sm:$0xff]
        %v981 = vld [vmem:[#allocation2 + $0xd68] sm:$0xff]
        %v982 = vld [vmem:[#allocation2 + $0xd70] sm:$0xff]
        %v983 = vld [vmem:[#allocation2 + $0xd78] sm:$0xff]
        %v984 = vld [vmem:[#allocation2 + $0xd80] sm:$0xff]
        %v985 = vld [vmem:[#allocation2 + $0xd88] sm:$0xff]
        %v986 = vld [vmem:[#allocation2 + $0xd90] sm:$0xff]
        %v987 = vld [vmem:[#allocation2 + $0xd98] sm:$0xff]
        %v988 = vld [vmem:[#allocation2 + $0xda0] sm:$0xff]
        %v989 = vld [vmem:[#allocation2 + $0xda8] sm:$0xff]
        %v990 = vld [vmem:[#allocation2 + $0xdb0] sm:$0xff]
        %v991 = vld [vmem:[#allocation2 + $0xdb8] sm:$0xff]
        %v992 = vld [vmem:[#allocation2 + $0xdc0] sm:$0xff]
        %v993 = vld [vmem:[#allocation2 + $0xdc8] sm:$0xff]
        %v994 = vld [vmem:[#allocation2 + $0xdd0] sm:$0xff]
        %v995 = vld [vmem:[#allocation2 + $0xdd8] sm:$0xff]
        %v996 = vld [vmem:[#allocation2 + $0xde0] sm:$0xff]
        %v997 = vld [vmem:[#allocation2 + $0xde8] sm:$0xff]
        %v998 = vld [vmem:[#allocation2 + $0xdf0] sm:$0xff]
        %v999 = vld [vmem:[#allocation2 + $0xdf8] sm:$0xff]
        %v1000 = vld [vmem:[#allocation2 + $0xe00] sm:$0xff]
        %v1001 = vld [vmem:[#allocation2 + $0xe08] sm:$0xff]
        %v1002 = vld [vmem:[#allocation2 + $0xe10] sm:$0xff]
        %v1003 = vld [vmem:[#allocation2 + $0xe18] sm:$0xff]
        %v1004 = vld [vmem:[#allocation2 + $0xe20] sm:$0xff]
        %v1005 = vld [vmem:[#allocation2 + $0xe28] sm:$0xff]
        %v1006 = vld [vmem:[#allocation2 + $0xe30] sm:$0xff]
        %v1007 = vld [vmem:[#allocation2 + $0xe38] sm:$0xff]
        %v1008 = vld [vmem:[#allocation2 + $0xe40] sm:$0xff]
        %v1009 = vld [vmem:[#allocation2 + $0xe48] sm:$0xff]
        %v1010 = vld [vmem:[#allocation2 + $0xe50] sm:$0xff]
        %v1011 = vld [vmem:[#allocation2 + $0xe58] sm:$0xff]
        %v1012 = vld [vmem:[#allocation2 + $0xe60] sm:$0xff]
        %v1013 = vld [vmem:[#allocation2 + $0xe68] sm:$0xff]
        %v1014 = vld [vmem:[#allocation2 + $0xe70] sm:$0xff]
        %v1015 = vld [vmem:[#allocation2 + $0xe78] sm:$0xff]
        %v1016 = vld [vmem:[#allocation2 + $0xe80] sm:$0xff]
        %v1017 = vld [vmem:[#allocation2 + $0xe88] sm:$0xff]
        %v1018 = vld [vmem:[#allocation2 + $0xe90] sm:$0xff]
        %v1019 = vld [vmem:[#allocation2 + $0xe98] sm:$0xff]
        %v1020 = vld [vmem:[#allocation2 + $0xea0] sm:$0xff]
        %v1021 = vld [vmem:[#allocation2 + $0xea8] sm:$0xff]
        %v1022 = vld [vmem:[#allocation2 + $0xeb0] sm:$0xff]
        %v1023 = vld [vmem:[#allocation2 + $0xeb8] sm:$0xff]
        %v1024 = vld [vmem:[#allocation2 + $0xec0] sm:$0xff]
        %v1025 = vld [vmem:[#allocation2 + $0xec8] sm:$0xff]
        %v1026 = vld [vmem:[#allocation2 + $0xed0] sm:$0xff]
        %v1027 = vld [vmem:[#allocation2 + $0xed8] sm:$0xff]
        %v1028 = vld [vmem:[#allocation2 + $0xee0] sm:$0xff]
        %v1029 = vld [vmem:[#allocation2 + $0xee8] sm:$0xff]
        %v1030 = vld [vmem:[#allocation2 + $0xef0] sm:$0xff]
        %v1031 = vld [vmem:[#allocation2 + $0xef8] sm:$0xff]
        %v1032 = vld [vmem:[#allocation2 + $0xf00] sm:$0xff]
        %v1033 = vld [vmem:[#allocation2 + $0xf08] sm:$0xff]
        %v1034 = vld [vmem:[#allocation2 + $0xf10] sm:$0xff]
        %v1035 = vld [vmem:[#allocation2 + $0xf18] sm:$0xff]
        %v1036 = vld [vmem:[#allocation2 + $0xf20] sm:$0xff]
        %v1037 = vld [vmem:[#allocation2 + $0xf28] sm:$0xff]
        %v1038 = vld [vmem:[#allocation2 + $0xf30] sm:$0xff]
        %v1039 = vld [vmem:[#allocation2 + $0xf38] sm:$0xff]
        %v1040 = vld [vmem:[#allocation2 + $0xf40] sm:$0xff]
        %v1041 = vld [vmem:[#allocation2 + $0xf48] sm:$0xff]
        %v1042 = vld [vmem:[#allocation2 + $0xf50] sm:$0xff]
        %v1043 = vld [vmem:[#allocation2 + $0xf58] sm:$0xff]
        %v1044 = vld [vmem:[#allocation2 + $0xf60] sm:$0xff]
        %v1045 = vld [vmem:[#allocation2 + $0xf68] sm:$0xff]
        %v1046 = vld [vmem:[#allocation2 + $0xf70] sm:$0xff]
        %v1047 = vld [vmem:[#allocation2 + $0xf78] sm:$0xff]
        %v1048 = vld [vmem:[#allocation2 + $0xf80] sm:$0xff]
        %v1049 = vld [vmem:[#allocation2 + $0xf88] sm:$0xff]
        %v1050 = vld [vmem:[#allocation2 + $0xf90] sm:$0xff]
        %v1051 = vld [vmem:[#allocation2 + $0xf98] sm:$0xff]
        %v1052 = vld [vmem:[#allocation2 + $0xfa0] sm:$0xff]
        %v1053 = vld [vmem:[#allocation2 + $0xfa8] sm:$0xff]
        %v1054 = vld [vmem:[#allocation2 + $0xfb0] sm:$0xff]
        %v1055 = vld [vmem:[#allocation2 + $0xfb8] sm:$0xff]
        %v1056 = vld [vmem:[#allocation2 + $0xfc0] sm:$0xff]
        %v1057 = vld [vmem:[#allocation2 + $0xfc8] sm:$0xff]
        %v1058 = vld [vmem:[#allocation2 + $0xfd0] sm:$0xff]
        %v1059 = vld [vmem:[#allocation2 + $0xfd8] sm:$0xff]
        %v1060 = vld [vmem:[#allocation2 + $0xfe0] sm:$0xff]
        %v1061 = vld [vmem:[#allocation2 + $0xfe8] sm:$0xff]
        %v1062 = vld [vmem:[#allocation2 + $0xff0] sm:$0xff]
        %v1063 = vld [vmem:[#allocation2 + $0xff8] sm:$0xff]
        %v1064 = vld [vmem:[%s203] sm:$0xf]
        %v1066 = vlaneseq
        %v1067 = vshrl.u32 %v1066, 7
        %v1068 = vsub.s32 0, %v1067
        %v1069 = vrot.slane %v1064, %v1068
        %v1070 = vlaneseq
        %v1071 = vshrl.u32 %v1070, 7
        %v1072 = vsub.s32 1, %v1071
        %v1073 = vrot.slane %v1064, %v1072
        %v1074 = vlaneseq
        %v1075 = vshrl.u32 %v1074, 7
        %v1076 = vsub.s32 2, %v1075
        %v1077 = vrot.slane %v1064, %v1076
        %v1078 = vlaneseq
        %v1079 = vshrl.u32 %v1078, 7
        %v1080 = vsub.s32 3, %v1079
        %v1081 = vrot.slane %v1064, %v1080
        %1086 = vmatprep.subr.bf16.mxu0 %v553
        %1087 = vmatpush1.bf16.msra.mxu0 %v552
        %1088 = vmatprep.subr.bf16.mxu0 %v557
        %1089 = vmatpush1.bf16.msra.mxu0 %v556
        %1090 = vmatprep.subr.bf16.mxu0 %v561
        %1091 = vmatpush1.bf16.msra.mxu0 %v560
        %1092 = vmatprep.subr.bf16.mxu0 %v565
        %1093 = vmatpush1.bf16.msra.mxu0 %v564
        %1094 = vmatprep.subr.bf16.mxu0 %v569
        %1095 = vmatpush1.bf16.msra.mxu0 %v568
        %1096 = vmatprep.subr.bf16.mxu0 %v573
        %1097 = vmatpush1.bf16.msra.mxu0 %v572
        %1098 = vmatprep.subr.bf16.mxu0 %v577
        %1099 = vmatpush1.bf16.msra.mxu0 %v576
        %1100 = vmatprep.subr.bf16.mxu0 %v581
        %1101 = vmatpush1.bf16.msra.mxu0 %v580
        %1102 = vmatprep.subr.bf16.mxu0 %v585
        %1103 = vmatpush1.bf16.msra.mxu0 %v584
        %1104 = vmatprep.subr.bf16.mxu0 %v589
        %1105 = vmatpush1.bf16.msra.mxu0 %v588
        %1106 = vmatprep.subr.bf16.mxu0 %v593
        %1107 = vmatpush1.bf16.msra.mxu0 %v592
        %1108 = vmatprep.subr.bf16.mxu0 %v597
        %1109 = vmatpush1.bf16.msra.mxu0 %v596
        %1110 = vmatprep.subr.bf16.mxu0 %v601
        %1111 = vmatpush1.bf16.msra.mxu0 %v600
        %1112 = vmatprep.subr.bf16.mxu0 %v605
        %1113 = vmatpush1.bf16.msra.mxu0 %v604
        %1114 = vmatprep.subr.bf16.mxu0 %v609
        %1115 = vmatpush1.bf16.msra.mxu0 %v608
        %1116 = vmatprep.subr.bf16.mxu0 %v613
        %1117 = vmatpush1.bf16.msra.mxu0 %v612
        %1118 = vmatprep.mubr.bf16.mxu0 %v533
        %1119 = vmatmul.mubr.bf16.gmra.mrb[0].mxu0 %v532
        %v1120 = vpop.f32.mrb[0].mxu0
        %v1121 = vadd.f32 %v1069, %v1120
        %v1122 = vpop.f32.mrb[0].mxu0
        %v1123 = vadd.f32 %v1073, %v1122
        %v1124 = vpop.f32.mrb[0].mxu0
        %v1125 = vpop.f32.mrb[0].mxu0
        %1126 = vdwg.mxu0
        %1127 = vmatprep.subr.bf16.mxu0 %v617
        %1128 = vmatpush1.bf16.msra.mxu0 %v616
        %1129 = vmatprep.subr.bf16.mxu0 %v621
        %1130 = vmatpush1.bf16.msra.mxu0 %v620
        %1131 = vmatprep.subr.bf16.mxu0 %v625
        %1132 = vmatpush1.bf16.msra.mxu0 %v624
        %1133 = vmatprep.subr.bf16.mxu0 %v629
        %1134 = vmatpush1.bf16.msra.mxu0 %v628
        %1135 = vmatprep.subr.bf16.mxu0 %v633
        %1136 = vmatpush1.bf16.msra.mxu0 %v632
        %1137 = vmatprep.subr.bf16.mxu0 %v637
        %1138 = vmatpush1.bf16.msra.mxu0 %v636
        %1139 = vmatprep.subr.bf16.mxu0 %v641
        %1140 = vmatpush1.bf16.msra.mxu0 %v640
        %1141 = vmatprep.subr.bf16.mxu0 %v645
        %1142 = vmatpush1.bf16.msra.mxu0 %v644
        %1143 = vmatprep.subr.bf16.mxu0 %v649
        %1144 = vmatpush1.bf16.msra.mxu0 %v648
        %1145 = vmatprep.subr.bf16.mxu0 %v653
        %1146 = vmatpush1.bf16.msra.mxu0 %v652
        %1147 = vmatprep.subr.bf16.mxu0 %v657
        %1148 = vmatpush1.bf16.msra.mxu0 %v656
        %1149 = vmatprep.subr.bf16.mxu0 %v661
        %1150 = vmatpush1.bf16.msra.mxu0 %v660
        %1151 = vmatprep.subr.bf16.mxu0 %v665
        %1152 = vmatpush1.bf16.msra.mxu0 %v664
        %1153 = vmatprep.subr.bf16.mxu0 %v669
        %1154 = vmatpush1.bf16.msra.mxu0 %v668
        %1155 = vmatprep.subr.bf16.mxu0 %v673
        %1156 = vmatpush1.bf16.msra.mxu0 %v672
        %1157 = vmatprep.subr.bf16.mxu0 %v677
        %1158 = vmatpush1.bf16.msra.mxu0 %v676
        %1159 = vmatprep.mubr.bf16.mxu0 %v535
        %1160 = vmatmul.mubr.bf16.gmra.mrb[0].mxu0 %v534
        %v1161 = vpop.f32.mrb[0].mxu0
        %v1162 = vadd.f32 %v1121, %v1161
        %v1163 = vpop.f32.mrb[0].mxu0
        %v1164 = vadd.f32 %v1123, %v1163
        %v1165 = vpop.f32.mrb[0].mxu0
        %v1166 = vpop.f32.mrb[0].mxu0
        %1167 = vdwg.mxu0
        %1168 = vmatprep.subr.bf16.mxu0 %v681
        %1169 = vmatpush1.bf16.msra.mxu0 %v680
        %1170 = vmatprep.subr.bf16.mxu0 %v685
        %1171 = vmatpush1.bf16.msra.mxu0 %v684
        %1172 = vmatprep.subr.bf16.mxu0 %v689
        %1173 = vmatpush1.bf16.msra.mxu0 %v688
        %1174 = vmatprep.subr.bf16.mxu0 %v693
        %1175 = vmatpush1.bf16.msra.mxu0 %v692
        %1176 = vmatprep.subr.bf16.mxu0 %v697
        %1177 = vmatpush1.bf16.msra.mxu0 %v696
        %1178 = vmatprep.subr.bf16.mxu0 %v701
        %1179 = vmatpush1.bf16.msra.mxu0 %v700
        %1180 = vmatprep.subr.bf16.mxu0 %v705
        %1181 = vmatpush1.bf16.msra.mxu0 %v704
        %1182 = vmatprep.subr.bf16.mxu0 %v709
        %1183 = vmatpush1.bf16.msra.mxu0 %v708
        %1184 = vmatprep.subr.bf16.mxu0 %v713
        %1185 = vmatpush1.bf16.msra.mxu0 %v712
        %1186 = vmatprep.subr.bf16.mxu0 %v717
        %1187 = vmatpush1.bf16.msra.mxu0 %v716
        %1188 = vmatprep.subr.bf16.mxu0 %v721
        %1189 = vmatpush1.bf16.msra.mxu0 %v720
        %1190 = vmatprep.subr.bf16.mxu0 %v725
        %1191 = vmatpush1.bf16.msra.mxu0 %v724
        %1192 = vmatprep.subr.bf16.mxu0 %v729
        %1193 = vmatpush1.bf16.msra.mxu0 %v728
        %1194 = vmatprep.subr.bf16.mxu0 %v733
        %1195 = vmatpush1.bf16.msra.mxu0 %v732
        %1196 = vmatprep.subr.bf16.mxu0 %v737
        %1197 = vmatpush1.bf16.msra.mxu0 %v736
        %1198 = vmatprep.subr.bf16.mxu0 %v741
        %1199 = vmatpush1.bf16.msra.mxu0 %v740
        %1200 = vmatprep.mubr.bf16.mxu0 %v537
        %1201 = vmatmul.mubr.bf16.gmra.mrb[0].mxu0 %v536
        %v1202 = vpop.f32.mrb[0].mxu0
        %v1203 = vadd.f32 %v1162, %v1202
        %v1204 = vpop.f32.mrb[0].mxu0
        %v1205 = vadd.f32 %v1164, %v1204
        %v1206 = vpop.f32.mrb[0].mxu0
        %v1207 = vpop.f32.mrb[0].mxu0
        %1208 = vdwg.mxu0
        %1209 = vmatprep.subr.bf16.mxu0 %v745
        %1210 = vmatpush1.bf16.msra.mxu0 %v744
        %1211 = vmatprep.subr.bf16.mxu0 %v749
        %1212 = vmatpush1.bf16.msra.mxu0 %v748
        %1213 = vmatprep.subr.bf16.mxu0 %v753
        %1214 = vmatpush1.bf16.msra.mxu0 %v752
        %1215 = vmatprep.subr.bf16.mxu0 %v757
        %1216 = vmatpush1.bf16.msra.mxu0 %v756
        %1217 = vmatprep.subr.bf16.mxu0 %v761
        %1218 = vmatpush1.bf16.msra.mxu0 %v760
        %1219 = vmatprep.subr.bf16.mxu0 %v765
        %1220 = vmatpush1.bf16.msra.mxu0 %v764
        %1221 = vmatprep.subr.bf16.mxu0 %v769
        %1222 = vmatpush1.bf16.msra.mxu0 %v768
        %1223 = vmatprep.subr.bf16.mxu0 %v773
        %1224 = vmatpush1.bf16.msra.mxu0 %v772
        %1225 = vmatprep.subr.bf16.mxu0 %v777
        %1226 = vmatpush1.bf16.msra.mxu0 %v776
        %1227 = vmatprep.subr.bf16.mxu0 %v781
        %1228 = vmatpush1.bf16.msra.mxu0 %v780
        %1229 = vmatprep.subr.bf16.mxu0 %v785
        %1230 = vmatpush1.bf16.msra.mxu0 %v784
        %1231 = vmatprep.subr.bf16.mxu0 %v789
        %1232 = vmatpush1.bf16.msra.mxu0 %v788
        %1233 = vmatprep.subr.bf16.mxu0 %v793
        %1234 = vmatpush1.bf16.msra.mxu0 %v792
        %1235 = vmatprep.subr.bf16.mxu0 %v797
        %1236 = vmatpush1.bf16.msra.mxu0 %v796
        %1237 = vmatprep.subr.bf16.mxu0 %v801
        %1238 = vmatpush1.bf16.msra.mxu0 %v800
        %1239 = vmatprep.subr.bf16.mxu0 %v805
        %1240 = vmatpush1.bf16.msra.mxu0 %v804
        %1241 = vmatprep.mubr.bf16.mxu0 %v539
        %1242 = vmatmul.mubr.bf16.gmra.mrb[0].mxu0 %v538
        %v1243 = vpop.f32.mrb[0].mxu0
        %v1244 = vadd.f32 %v1203, %v1243
        %v1245 = vpop.f32.mrb[0].mxu0
        %v1246 = vadd.f32 %v1205, %v1245
        %v1247 = vpop.f32.mrb[0].mxu0
        %v1248 = vpop.f32.mrb[0].mxu0
        %1249 = vdwg.mxu0
        %1250 = vmatprep.subr.bf16.mxu0 %v809
        %1251 = vmatpush1.bf16.msra.mxu0 %v808
        %1252 = vmatprep.subr.bf16.mxu0 %v813
        %1253 = vmatpush1.bf16.msra.mxu0 %v812
        %1254 = vmatprep.subr.bf16.mxu0 %v817
        %1255 = vmatpush1.bf16.msra.mxu0 %v816
        %1256 = vmatprep.subr.bf16.mxu0 %v821
        %1257 = vmatpush1.bf16.msra.mxu0 %v820
        %1258 = vmatprep.subr.bf16.mxu0 %v825
        %1259 = vmatpush1.bf16.msra.mxu0 %v824
        %1260 = vmatprep.subr.bf16.mxu0 %v829
        %1261 = vmatpush1.bf16.msra.mxu0 %v828
        %1262 = vmatprep.subr.bf16.mxu0 %v833
        %1263 = vmatpush1.bf16.msra.mxu0 %v832
        %1264 = vmatprep.subr.bf16.mxu0 %v837
        %1265 = vmatpush1.bf16.msra.mxu0 %v836
        %1266 = vmatprep.subr.bf16.mxu0 %v841
        %1267 = vmatpush1.bf16.msra.mxu0 %v840
        %1268 = vmatprep.subr.bf16.mxu0 %v845
        %1269 = vmatpush1.bf16.msra.mxu0 %v844
        %1270 = vmatprep.subr.bf16.mxu0 %v849
        %1271 = vmatpush1.bf16.msra.mxu0 %v848
        %1272 = vmatprep.subr.bf16.mxu0 %v853
        %1273 = vmatpush1.bf16.msra.mxu0 %v852
        %1274 = vmatprep.subr.bf16.mxu0 %v857
        %1275 = vmatpush1.bf16.msra.mxu0 %v856
        %1276 = vmatprep.subr.bf16.mxu0 %v861
        %1277 = vmatpush1.bf16.msra.mxu0 %v860
        %1278 = vmatprep.subr.bf16.mxu0 %v865
        %1279 = vmatpush1.bf16.msra.mxu0 %v864
        %1280 = vmatprep.subr.bf16.mxu0 %v869
        %1281 = vmatpush1.bf16.msra.mxu0 %v868
        %1282 = vmatprep.mubr.bf16.mxu0 %v541
        %1283 = vmatmul.mubr.bf16.gmra.mrb[0].mxu0 %v540
        %v1284 = vpop.f32.mrb[0].mxu0
        %v1285 = vadd.f32 %v1244, %v1284
        %v1286 = vpop.f32.mrb[0].mxu0
        %v1287 = vadd.f32 %v1246, %v1286
        %v1288 = vpop.f32.mrb[0].mxu0
        %v1289 = vpop.f32.mrb[0].mxu0
        %1290 = vdwg.mxu0
        %1291 = vmatprep.subr.bf16.mxu0 %v873
        %1292 = vmatpush1.bf16.msra.mxu0 %v872
        %1293 = vmatprep.subr.bf16.mxu0 %v877
        %1294 = vmatpush1.bf16.msra.mxu0 %v876
        %1295 = vmatprep.subr.bf16.mxu0 %v881
        %1296 = vmatpush1.bf16.msra.mxu0 %v880
        %1297 = vmatprep.subr.bf16.mxu0 %v885
        %1298 = vmatpush1.bf16.msra.mxu0 %v884
        %1299 = vmatprep.subr.bf16.mxu0 %v889
        %1300 = vmatpush1.bf16.msra.mxu0 %v888
        %1301 = vmatprep.subr.bf16.mxu0 %v893
        %1302 = vmatpush1.bf16.msra.mxu0 %v892
        %1303 = vmatprep.subr.bf16.mxu0 %v897
        %1304 = vmatpush1.bf16.msra.mxu0 %v896
        %1305 = vmatprep.subr.bf16.mxu0 %v901
        %1306 = vmatpush1.bf16.msra.mxu0 %v900
        %1307 = vmatprep.subr.bf16.mxu0 %v905
        %1308 = vmatpush1.bf16.msra.mxu0 %v904
        %1309 = vmatprep.subr.bf16.mxu0 %v909
        %1310 = vmatpush1.bf16.msra.mxu0 %v908
        %1311 = vmatprep.subr.bf16.mxu0 %v913
        %1312 = vmatpush1.bf16.msra.mxu0 %v912
        %1313 = vmatprep.subr.bf16.mxu0 %v917
        %1314 = vmatpush1.bf16.msra.mxu0 %v916
        %1315 = vmatprep.subr.bf16.mxu0 %v921
        %1316 = vmatpush1.bf16.msra.mxu0 %v920
        %1317 = vmatprep.subr.bf16.mxu0 %v925
        %1318 = vmatpush1.bf16.msra.mxu0 %v924
        %1319 = vmatprep.subr.bf16.mxu0 %v929
        %1320 = vmatpush1.bf16.msra.mxu0 %v928
        %1321 = vmatprep.subr.bf16.mxu0 %v933
        %1322 = vmatpush1.bf16.msra.mxu0 %v932
        %1323 = vmatprep.mubr.bf16.mxu0 %v543
        %1324 = vmatmul.mubr.bf16.gmra.mrb[0].mxu0 %v542
        %v1325 = vpop.f32.mrb[0].mxu0
        %v1326 = vadd.f32 %v1285, %v1325
        %v1327 = vpop.f32.mrb[0].mxu0
        %v1328 = vadd.f32 %v1287, %v1327
        %v1329 = vpop.f32.mrb[0].mxu0
        %v1330 = vpop.f32.mrb[0].mxu0
        %1331 = vdwg.mxu0
        %1332 = vmatprep.subr.bf16.mxu0 %v937
        %1333 = vmatpush1.bf16.msra.mxu0 %v936
        %1334 = vmatprep.subr.bf16.mxu0 %v941
        %1335 = vmatpush1.bf16.msra.mxu0 %v940
        %1336 = vmatprep.subr.bf16.mxu0 %v945
        %1337 = vmatpush1.bf16.msra.mxu0 %v944
        %1338 = vmatprep.subr.bf16.mxu0 %v949
        %1339 = vmatpush1.bf16.msra.mxu0 %v948
        %1340 = vmatprep.subr.bf16.mxu0 %v953
        %1341 = vmatpush1.bf16.msra.mxu0 %v952
        %1342 = vmatprep.subr.bf16.mxu0 %v957
        %1343 = vmatpush1.bf16.msra.mxu0 %v956
        %1344 = vmatprep.subr.bf16.mxu0 %v961
        %1345 = vmatpush1.bf16.msra.mxu0 %v960
        %1346 = vmatprep.subr.bf16.mxu0 %v965
        %1347 = vmatpush1.bf16.msra.mxu0 %v964
        %1348 = vmatprep.subr.bf16.mxu0 %v969
        %1349 = vmatpush1.bf16.msra.mxu0 %v968
        %1350 = vmatprep.subr.bf16.mxu0 %v973
        %1351 = vmatpush1.bf16.msra.mxu0 %v972
        %1352 = vmatprep.subr.bf16.mxu0 %v977
        %1353 = vmatpush1.bf16.msra.mxu0 %v976
        %1354 = vmatprep.subr.bf16.mxu0 %v981
        %1355 = vmatpush1.bf16.msra.mxu0 %v980
        %1356 = vmatprep.subr.bf16.mxu0 %v985
        %1357 = vmatpush1.bf16.msra.mxu0 %v984
        %1358 = vmatprep.subr.bf16.mxu0 %v989
        %1359 = vmatpush1.bf16.msra.mxu0 %v988
        %1360 = vmatprep.subr.bf16.mxu0 %v993
        %1361 = vmatpush1.bf16.msra.mxu0 %v992
        %1362 = vmatprep.subr.bf16.mxu0 %v997
        %1363 = vmatpush1.bf16.msra.mxu0 %v996
        %1364 = vmatprep.mubr.bf16.mxu0 %v545
        %1365 = vmatmul.mubr.bf16.gmra.mrb[0].mxu0 %v544
        %v1366 = vpop.f32.mrb[0].mxu0
        %v1367 = vadd.f32 %v1326, %v1366
        %v1368 = vpop.f32.mrb[0].mxu0
        %v1369 = vadd.f32 %v1328, %v1368
        %v1370 = vpop.f32.mrb[0].mxu0
        %v1371 = vpop.f32.mrb[0].mxu0
        %1372 = vdwg.mxu0
        %1373 = vmatprep.subr.bf16.mxu0 %v1001
        %1374 = vmatpush1.bf16.msra.mxu0 %v1000
        %1375 = vmatprep.subr.bf16.mxu0 %v1005
        %1376 = vmatpush1.bf16.msra.mxu0 %v1004
        %1377 = vmatprep.subr.bf16.mxu0 %v1009
        %1378 = vmatpush1.bf16.msra.mxu0 %v1008
        %1379 = vmatprep.subr.bf16.mxu0 %v1013
        %1380 = vmatpush1.bf16.msra.mxu0 %v1012
        %1381 = vmatprep.subr.bf16.mxu0 %v1017
        %1382 = vmatpush1.bf16.msra.mxu0 %v1016
        %1383 = vmatprep.subr.bf16.mxu0 %v1021
        %1384 = vmatpush1.bf16.msra.mxu0 %v1020
        %1385 = vmatprep.subr.bf16.mxu0 %v1025
        %1386 = vmatpush1.bf16.msra.mxu0 %v1024
        %1387 = vmatprep.subr.bf16.mxu0 %v1029
        %1388 = vmatpush1.bf16.msra.mxu0 %v1028
        %1389 = vmatprep.subr.bf16.mxu0 %v1033
        %1390 = vmatpush1.bf16.msra.mxu0 %v1032
        %1391 = vmatprep.subr.bf16.mxu0 %v1037
        %1392 = vmatpush1.bf16.msra.mxu0 %v1036
        %1393 = vmatprep.subr.bf16.mxu0 %v1041
        %1394 = vmatpush1.bf16.msra.mxu0 %v1040
        %1395 = vmatprep.subr.bf16.mxu0 %v1045
        %1396 = vmatpush1.bf16.msra.mxu0 %v1044
        %1397 = vmatprep.subr.bf16.mxu0 %v1049
        %1398 = vmatpush1.bf16.msra.mxu0 %v1048
        %1399 = vmatprep.subr.bf16.mxu0 %v1053
        %1400 = vmatpush1.bf16.msra.mxu0 %v1052
        %1401 = vmatprep.subr.bf16.mxu0 %v1057
        %1402 = vmatpush1.bf16.msra.mxu0 %v1056
        %1403 = vmatprep.subr.bf16.mxu0 %v1061
        %1404 = vmatpush1.bf16.msra.mxu0 %v1060
        %1405 = vmatprep.mubr.bf16.mxu0 %v547
        %1406 = vmatmul.mubr.bf16.gmra.mrb[0].mxu0 %v546
        %v1407 = vpop.f32.mrb[0].mxu0
        %v1408 = vadd.f32 %v1367, %v1407
        %v1409 = vpop.f32.mrb[0].mxu0
        %v1410 = vadd.f32 %v1369, %v1409
        %v1411 = vpop.f32.mrb[0].mxu0
        %v1412 = vpop.f32.mrb[0].mxu0
        %1413 = vdwg.mxu0
        %1414 = vmatprep.subr.bf16.mxu0 %v555
        %1415 = vmatpush1.bf16.msra.mxu0 %v554
        %1416 = vmatprep.subr.bf16.mxu0 %v559
        %1417 = vmatpush1.bf16.msra.mxu0 %v558
        %1418 = vmatprep.subr.bf16.mxu0 %v563
        %1419 = vmatpush1.bf16.msra.mxu0 %v562
        %1420 = vmatprep.subr.bf16.mxu0 %v567
        %1421 = vmatpush1.bf16.msra.mxu0 %v566
        %1422 = vmatprep.subr.bf16.mxu0 %v571
        %1423 = vmatpush1.bf16.msra.mxu0 %v570
        %1424 = vmatprep.subr.bf16.mxu0 %v575
        %1425 = vmatpush1.bf16.msra.mxu0 %v574
        %1426 = vmatprep.subr.bf16.mxu0 %v579
        %1427 = vmatpush1.bf16.msra.mxu0 %v578
        %1428 = vmatprep.subr.bf16.mxu0 %v583
        %1429 = vmatpush1.bf16.msra.mxu0 %v582
        %1430 = vmatprep.subr.bf16.mxu0 %v587
        %1431 = vmatpush1.bf16.msra.mxu0 %v586
        %1432 = vmatprep.subr.bf16.mxu0 %v591
        %1433 = vmatpush1.bf16.msra.mxu0 %v590
        %1434 = vmatprep.subr.bf16.mxu0 %v595
        %1435 = vmatpush1.bf16.msra.mxu0 %v594
        %1436 = vmatprep.subr.bf16.mxu0 %v599
        %1437 = vmatpush1.bf16.msra.mxu0 %v598
        %1438 = vmatprep.subr.bf16.mxu0 %v603
        %1439 = vmatpush1.bf16.msra.mxu0 %v602
        %1440 = vmatprep.subr.bf16.mxu0 %v607
        %1441 = vmatpush1.bf16.msra.mxu0 %v606
        %1442 = vmatprep.subr.bf16.mxu0 %v611
        %1443 = vmatpush1.bf16.msra.mxu0 %v610
        %1444 = vmatprep.subr.bf16.mxu0 %v615
        %1445 = vmatpush1.bf16.msra.mxu0 %v614
        %1446 = vmatprep.mubr.bf16.mxu0 %v533
        %1447 = vmatmul.mubr.bf16.gmra.mrb[0].mxu0 %v532
        %v1448 = vpop.f32.mrb[0].mxu0
        %v1449 = vadd.f32 %v1077, %v1448
        %v1450 = vpop.f32.mrb[0].mxu0
        %v1451 = vadd.f32 %v1081, %v1450
        %v1452 = vpop.f32.mrb[0].mxu0
        %v1453 = vpop.f32.mrb[0].mxu0
        %1454 = vdwg.mxu0
        %1455 = vmatprep.subr.bf16.mxu0 %v619
        %1456 = vmatpush1.bf16.msra.mxu0 %v618
        %1457 = vmatprep.subr.bf16.mxu0 %v623
        %1458 = vmatpush1.bf16.msra.mxu0 %v622
        %1459 = vmatprep.subr.bf16.mxu0 %v627
        %1460 = vmatpush1.bf16.msra.mxu0 %v626
        %1461 = vmatprep.subr.bf16.mxu0 %v631
        %1462 = vmatpush1.bf16.msra.mxu0 %v630
        %1463 = vmatprep.subr.bf16.mxu0 %v635
        %1464 = vmatpush1.bf16.msra.mxu0 %v634
        %1465 = vmatprep.subr.bf16.mxu0 %v639
        %1466 = vmatpush1.bf16.msra.mxu0 %v638
        %1467 = vmatprep.subr.bf16.mxu0 %v643
        %1468 = vmatpush1.bf16.msra.mxu0 %v642
        %1469 = vmatprep.subr.bf16.mxu0 %v647
        %1470 = vmatpush1.bf16.msra.mxu0 %v646
        %1471 = vmatprep.subr.bf16.mxu0 %v651
        %1472 = vmatpush1.bf16.msra.mxu0 %v650
        %1473 = vmatprep.subr.bf16.mxu0 %v655
        %1474 = vmatpush1.bf16.msra.mxu0 %v654
        %1475 = vmatprep.subr.bf16.mxu0 %v659
        %1476 = vmatpush1.bf16.msra.mxu0 %v658
        %1477 = vmatprep.subr.bf16.mxu0 %v663
        %1478 = vmatpush1.bf16.msra.mxu0 %v662
        %1479 = vmatprep.subr.bf16.mxu0 %v667
        %1480 = vmatpush1.bf16.msra.mxu0 %v666
        %1481 = vmatprep.subr.bf16.mxu0 %v671
        %1482 = vmatpush1.bf16.msra.mxu0 %v670
        %1483 = vmatprep.subr.bf16.mxu0 %v675
        %1484 = vmatpush1.bf16.msra.mxu0 %v674
        %1485 = vmatprep.subr.bf16.mxu0 %v679
        %1486 = vmatpush1.bf16.msra.mxu0 %v678
        %1487 = vmatprep.mubr.bf16.mxu0 %v535
        %1488 = vmatmul.mubr.bf16.gmra.mrb[0].mxu0 %v534
        %v1489 = vpop.f32.mrb[0].mxu0
        %v1490 = vadd.f32 %v1449, %v1489
        %v1491 = vpop.f32.mrb[0].mxu0
        %v1492 = vadd.f32 %v1451, %v1491
        %v1493 = vpop.f32.mrb[0].mxu0
        %v1494 = vpop.f32.mrb[0].mxu0
        %1495 = vdwg.mxu0
        %1496 = vmatprep.subr.bf16.mxu0 %v683
        %1497 = vmatpush1.bf16.msra.mxu0 %v682
        %1498 = vmatprep.subr.bf16.mxu0 %v687
        %1499 = vmatpush1.bf16.msra.mxu0 %v686
        %1500 = vmatprep.subr.bf16.mxu0 %v691
        %1501 = vmatpush1.bf16.msra.mxu0 %v690
        %1502 = vmatprep.subr.bf16.mxu0 %v695
        %1503 = vmatpush1.bf16.msra.mxu0 %v694
        %1504 = vmatprep.subr.bf16.mxu0 %v699
        %1505 = vmatpush1.bf16.msra.mxu0 %v698
        %1506 = vmatprep.subr.bf16.mxu0 %v703
        %1507 = vmatpush1.bf16.msra.mxu0 %v702
        %1508 = vmatprep.subr.bf16.mxu0 %v707
        %1509 = vmatpush1.bf16.msra.mxu0 %v706
        %1510 = vmatprep.subr.bf16.mxu0 %v711
        %1511 = vmatpush1.bf16.msra.mxu0 %v710
        %1512 = vmatprep.subr.bf16.mxu0 %v715
        %1513 = vmatpush1.bf16.msra.mxu0 %v714
        %1514 = vmatprep.subr.bf16.mxu0 %v719
        %1515 = vmatpush1.bf16.msra.mxu0 %v718
        %1516 = vmatprep.subr.bf16.mxu0 %v723
        %1517 = vmatpush1.bf16.msra.mxu0 %v722
        %1518 = vmatprep.subr.bf16.mxu0 %v727
        %1519 = vmatpush1.bf16.msra.mxu0 %v726
        %1520 = vmatprep.subr.bf16.mxu0 %v731
        %1521 = vmatpush1.bf16.msra.mxu0 %v730
        %1522 = vmatprep.subr.bf16.mxu0 %v735
        %1523 = vmatpush1.bf16.msra.mxu0 %v734
        %1524 = vmatprep.subr.bf16.mxu0 %v739
        %1525 = vmatpush1.bf16.msra.mxu0 %v738
        %1526 = vmatprep.subr.bf16.mxu0 %v743
        %1527 = vmatpush1.bf16.msra.mxu0 %v742
        %1528 = vmatprep.mubr.bf16.mxu0 %v537
        %1529 = vmatmul.mubr.bf16.gmra.mrb[0].mxu0 %v536
        %v1530 = vpop.f32.mrb[0].mxu0
        %v1531 = vadd.f32 %v1490, %v1530
        %v1532 = vpop.f32.mrb[0].mxu0
        %v1533 = vadd.f32 %v1492, %v1532
        %v1534 = vpop.f32.mrb[0].mxu0
        %v1535 = vpop.f32.mrb[0].mxu0
        %1536 = vdwg.mxu0
        %1537 = vmatprep.subr.bf16.mxu0 %v747
        %1538 = vmatpush1.bf16.msra.mxu0 %v746
        %1539 = vmatprep.subr.bf16.mxu0 %v751
        %1540 = vmatpush1.bf16.msra.mxu0 %v750
        %1541 = vmatprep.subr.bf16.mxu0 %v755
        %1542 = vmatpush1.bf16.msra.mxu0 %v754
        %1543 = vmatprep.subr.bf16.mxu0 %v759
        %1544 = vmatpush1.bf16.msra.mxu0 %v758
        %1545 = vmatprep.subr.bf16.mxu0 %v763
        %1546 = vmatpush1.bf16.msra.mxu0 %v762
        %1547 = vmatprep.subr.bf16.mxu0 %v767
        %1548 = vmatpush1.bf16.msra.mxu0 %v766
        %1549 = vmatprep.subr.bf16.mxu0 %v771
        %1550 = vmatpush1.bf16.msra.mxu0 %v770
        %1551 = vmatprep.subr.bf16.mxu0 %v775
        %1552 = vmatpush1.bf16.msra.mxu0 %v774
        %1553 = vmatprep.subr.bf16.mxu0 %v779
        %1554 = vmatpush1.bf16.msra.mxu0 %v778
        %1555 = vmatprep.subr.bf16.mxu0 %v783
        %1556 = vmatpush1.bf16.msra.mxu0 %v782
        %1557 = vmatprep.subr.bf16.mxu0 %v787
        %1558 = vmatpush1.bf16.msra.mxu0 %v786
        %1559 = vmatprep.subr.bf16.mxu0 %v791
        %1560 = vmatpush1.bf16.msra.mxu0 %v790
        %1561 = vmatprep.subr.bf16.mxu0 %v795
        %1562 = vmatpush1.bf16.msra.mxu0 %v794
        %1563 = vmatprep.subr.bf16.mxu0 %v799
        %1564 = vmatpush1.bf16.msra.mxu0 %v798
        %1565 = vmatprep.subr.bf16.mxu0 %v803
        %1566 = vmatpush1.bf16.msra.mxu0 %v802
        %1567 = vmatprep.subr.bf16.mxu0 %v807
        %1568 = vmatpush1.bf16.msra.mxu0 %v806
        %1569 = vmatprep.mubr.bf16.mxu0 %v539
        %1570 = vmatmul.mubr.bf16.gmra.mrb[0].mxu0 %v538
        %v1571 = vpop.f32.mrb[0].mxu0
        %v1572 = vadd.f32 %v1531, %v1571
        %v1573 = vpop.f32.mrb[0].mxu0
        %v1574 = vadd.f32 %v1533, %v1573
        %v1575 = vpop.f32.mrb[0].mxu0
        %v1576 = vpop.f32.mrb[0].mxu0
        %1577 = vdwg.mxu0
        %1578 = vmatprep.subr.bf16.mxu0 %v811
        %1579 = vmatpush1.bf16.msra.mxu0 %v810
        %1580 = vmatprep.subr.bf16.mxu0 %v815
        %1581 = vmatpush1.bf16.msra.mxu0 %v814
        %1582 = vmatprep.subr.bf16.mxu0 %v819
        %1583 = vmatpush1.bf16.msra.mxu0 %v818
        %1584 = vmatprep.subr.bf16.mxu0 %v823
        %1585 = vmatpush1.bf16.msra.mxu0 %v822
        %1586 = vmatprep.subr.bf16.mxu0 %v827
        %1587 = vmatpush1.bf16.msra.mxu0 %v826
        %1588 = vmatprep.subr.bf16.mxu0 %v831
        %1589 = vmatpush1.bf16.msra.mxu0 %v830
        %1590 = vmatprep.subr.bf16.mxu0 %v835
        %1591 = vmatpush1.bf16.msra.mxu0 %v834
        %1592 = vmatprep.subr.bf16.mxu0 %v839
        %1593 = vmatpush1.bf16.msra.mxu0 %v838
        %1594 = vmatprep.subr.bf16.mxu0 %v843
        %1595 = vmatpush1.bf16.msra.mxu0 %v842
        %1596 = vmatprep.subr.bf16.mxu0 %v847
        %1597 = vmatpush1.bf16.msra.mxu0 %v846
        %1598 = vmatprep.subr.bf16.mxu0 %v851
        %1599 = vmatpush1.bf16.msra.mxu0 %v850
        %1600 = vmatprep.subr.bf16.mxu0 %v855
        %1601 = vmatpush1.bf16.msra.mxu0 %v854
        %1602 = vmatprep.subr.bf16.mxu0 %v859
        %1603 = vmatpush1.bf16.msra.mxu0 %v858
        %1604 = vmatprep.subr.bf16.mxu0 %v863
        %1605 = vmatpush1.bf16.msra.mxu0 %v862
        %1606 = vmatprep.subr.bf16.mxu0 %v867
        %1607 = vmatpush1.bf16.msra.mxu0 %v866
        %1608 = vmatprep.subr.bf16.mxu0 %v871
        %1609 = vmatpush1.bf16.msra.mxu0 %v870
        %1610 = vmatprep.mubr.bf16.mxu0 %v541
        %1611 = vmatmul.mubr.bf16.gmra.mrb[0].mxu0 %v540
        %v1612 = vpop.f32.mrb[0].mxu0
        %v1613 = vadd.f32 %v1572, %v1612
        %v1614 = vpop.f32.mrb[0].mxu0
        %v1615 = vadd.f32 %v1574, %v1614
        %v1616 = vpop.f32.mrb[0].mxu0
        %v1617 = vpop.f32.mrb[0].mxu0
        %1618 = vdwg.mxu0
        %1619 = vmatprep.subr.bf16.mxu0 %v875
        %1620 = vmatpush1.bf16.msra.mxu0 %v874
        %1621 = vmatprep.subr.bf16.mxu0 %v879
        %1622 = vmatpush1.bf16.msra.mxu0 %v878
        %1623 = vmatprep.subr.bf16.mxu0 %v883
        %1624 = vmatpush1.bf16.msra.mxu0 %v882
        %1625 = vmatprep.subr.bf16.mxu0 %v887
        %1626 = vmatpush1.bf16.msra.mxu0 %v886
        %1627 = vmatprep.subr.bf16.mxu0 %v891
        %1628 = vmatpush1.bf16.msra.mxu0 %v890
        %1629 = vmatprep.subr.bf16.mxu0 %v895
        %1630 = vmatpush1.bf16.msra.mxu0 %v894
        %1631 = vmatprep.subr.bf16.mxu0 %v899
        %1632 = vmatpush1.bf16.msra.mxu0 %v898
        %1633 = vmatprep.subr.bf16.mxu0 %v903
        %1634 = vmatpush1.bf16.msra.mxu0 %v902
        %1635 = vmatprep.subr.bf16.mxu0 %v907
        %1636 = vmatpush1.bf16.msra.mxu0 %v906
        %1637 = vmatprep.subr.bf16.mxu0 %v911
        %1638 = vmatpush1.bf16.msra.mxu0 %v910
        %1639 = vmatprep.subr.bf16.mxu0 %v915
        %1640 = vmatpush1.bf16.msra.mxu0 %v914
        %1641 = vmatprep.subr.bf16.mxu0 %v919
        %1642 = vmatpush1.bf16.msra.mxu0 %v918
        %1643 = vmatprep.subr.bf16.mxu0 %v923
        %1644 = vmatpush1.bf16.msra.mxu0 %v922
        %1645 = vmatprep.subr.bf16.mxu0 %v927
        %1646 = vmatpush1.bf16.msra.mxu0 %v926
        %1647 = vmatprep.subr.bf16.mxu0 %v931
        %1648 = vmatpush1.bf16.msra.mxu0 %v930
        %1649 = vmatprep.subr.bf16.mxu0 %v935
        %1650 = vmatpush1.bf16.msra.mxu0 %v934
        %1651 = vmatprep.mubr.bf16.mxu0 %v543
        %1652 = vmatmul.mubr.bf16.gmra.mrb[0].mxu0 %v542
        %v1653 = vpop.f32.mrb[0].mxu0
        %v1654 = vadd.f32 %v1613, %v1653
        %v1655 = vpop.f32.mrb[0].mxu0
        %v1656 = vadd.f32 %v1615, %v1655
        %v1657 = vpop.f32.mrb[0].mxu0
        %v1658 = vpop.f32.mrb[0].mxu0
        %1659 = vdwg.mxu0
        %1660 = vmatprep.subr.bf16.mxu0 %v939
        %1661 = vmatpush1.bf16.msra.mxu0 %v938
        %1662 = vmatprep.subr.bf16.mxu0 %v943
        %1663 = vmatpush1.bf16.msra.mxu0 %v942
        %1664 = vmatprep.subr.bf16.mxu0 %v947
        %1665 = vmatpush1.bf16.msra.mxu0 %v946
        %1666 = vmatprep.subr.bf16.mxu0 %v951
        %1667 = vmatpush1.bf16.msra.mxu0 %v950
        %1668 = vmatprep.subr.bf16.mxu0 %v955
        %1669 = vmatpush1.bf16.msra.mxu0 %v954
        %1670 = vmatprep.subr.bf16.mxu0 %v959
        %1671 = vmatpush1.bf16.msra.mxu0 %v958
        %1672 = vmatprep.subr.bf16.mxu0 %v963
        %1673 = vmatpush1.bf16.msra.mxu0 %v962
        %1674 = vmatprep.subr.bf16.mxu0 %v967
        %1675 = vmatpush1.bf16.msra.mxu0 %v966
        %1676 = vmatprep.subr.bf16.mxu0 %v971
        %1677 = vmatpush1.bf16.msra.mxu0 %v970
        %1678 = vmatprep.subr.bf16.mxu0 %v975
        %1679 = vmatpush1.bf16.msra.mxu0 %v974
        %1680 = vmatprep.subr.bf16.mxu0 %v979
        %1681 = vmatpush1.bf16.msra.mxu0 %v978
        %1682 = vmatprep.subr.bf16.mxu0 %v983
        %1683 = vmatpush1.bf16.msra.mxu0 %v982
        %1684 = vmatprep.subr.bf16.mxu0 %v987
        %1685 = vmatpush1.bf16.msra.mxu0 %v986
        %1686 = vmatprep.subr.bf16.mxu0 %v991
        %1687 = vmatpush1.bf16.msra.mxu0 %v990
        %1688 = vmatprep.subr.bf16.mxu0 %v995
        %1689 = vmatpush1.bf16.msra.mxu0 %v994
        %1690 = vmatprep.subr.bf16.mxu0 %v999
        %1691 = vmatpush1.bf16.msra.mxu0 %v998
        %1692 = vmatprep.mubr.bf16.mxu0 %v545
        %1693 = vmatmul.mubr.bf16.gmra.mrb[0].mxu0 %v544
        %v1694 = vpop.f32.mrb[0].mxu0
        %v1695 = vadd.f32 %v1654, %v1694
        %v1696 = vpop.f32.mrb[0].mxu0
        %v1697 = vadd.f32 %v1656, %v1696
        %v1698 = vpop.f32.mrb[0].mxu0
        %v1699 = vpop.f32.mrb[0].mxu0
        %1700 = vdwg.mxu0
        %1701 = vmatprep.subr.bf16.mxu0 %v1003
        %1702 = vmatpush1.bf16.msra.mxu0 %v1002
        %1703 = vmatprep.subr.bf16.mxu0 %v1007
        %1704 = vmatpush1.bf16.msra.mxu0 %v1006
        %1705 = vmatprep.subr.bf16.mxu0 %v1011
        %1706 = vmatpush1.bf16.msra.mxu0 %v1010
        %1707 = vmatprep.subr.bf16.mxu0 %v1015
        %1708 = vmatpush1.bf16.msra.mxu0 %v1014
        %1709 = vmatprep.subr.bf16.mxu0 %v1019
        %1710 = vmatpush1.bf16.msra.mxu0 %v1018
        %1711 = vmatprep.subr.bf16.mxu0 %v1023
        %1712 = vmatpush1.bf16.msra.mxu0 %v1022
        %1713 = vmatprep.subr.bf16.mxu0 %v1027
        %1714 = vmatpush1.bf16.msra.mxu0 %v1026
        %1715 = vmatprep.subr.bf16.mxu0 %v1031
        %1716 = vmatpush1.bf16.msra.mxu0 %v1030
        %1717 = vmatprep.subr.bf16.mxu0 %v1035
        %1718 = vmatpush1.bf16.msra.mxu0 %v1034
        %1719 = vmatprep.subr.bf16.mxu0 %v1039
        %1720 = vmatpush1.bf16.msra.mxu0 %v1038
        %1721 = vmatprep.subr.bf16.mxu0 %v1043
        %1722 = vmatpush1.bf16.msra.mxu0 %v1042
        %1723 = vmatprep.subr.bf16.mxu0 %v1047
        %1724 = vmatpush1.bf16.msra.mxu0 %v1046
        %1725 = vmatprep.subr.bf16.mxu0 %v1051
        %1726 = vmatpush1.bf16.msra.mxu0 %v1050
        %1727 = vmatprep.subr.bf16.mxu0 %v1055
        %1728 = vmatpush1.bf16.msra.mxu0 %v1054
        %1729 = vmatprep.subr.bf16.mxu0 %v1059
        %1730 = vmatpush1.bf16.msra.mxu0 %v1058
        %1731 = vmatprep.subr.bf16.mxu0 %v1063
        %1732 = vmatpush1.bf16.msra.mxu0 %v1062
        %1733 = vmatprep.mubr.bf16.mxu0 %v547
        %1734 = vmatmul.mubr.bf16.gmra.mrb[0].mxu0 %v546
        %v1735 = vpop.f32.mrb[0].mxu0
        %v1736 = vadd.f32 %v1695, %v1735
        %v1737 = vpop.f32.mrb[0].mxu0
        %v1738 = vadd.f32 %v1697, %v1737
        %v1739 = vpop.f32.mrb[0].mxu0
        %v1740 = vpop.f32.mrb[0].mxu0
        %1741 = vdwg.mxu0
        %v1746 = vcombine.low %v1408, %v1410
        %v1747 = vcombine.low %v1736, %v1738
        %v1749 = vunpack.c.l.s4 1983009808
        %v1750 = vunpack.c.0.s8 %v1749
        %v1751 = vlaneseq
        %v1752 = vshrl.u32 %v1751, 7
        %v1753 = vsub.s32 %v1750, %v1752
        %v1754 = vrot.slane %v1746, %v1753
        %v1756 = vunpack.c.l.s4 1983009808
        %v1757 = vunpack.c.0.s8 %v1756
        %v1758 = vlaneseq
        %v1759 = vshrl.u32 %v1758, 7
        %v1760 = vsub.s32 %v1757, %v1759
        %v1761 = vrot.slane %v1747, %v1760
        %v1762 = vcombine.low %v1754, %v1761
        %1764 = vst [vmem:[%s227] sm:$0xff] %v1762
        %s1765 = sand.u32 %s120, 1
        %s1766 = scalar_lea.sflag [#allocation6], %s1765
        %s1767 = sand.u32 %s120, 1
        %s1768 = smul.addr %s1767, 8
        %s1769 = scalar_lea.vmem [#allocation9], %s1768
        // Predicated region
        $region45: #{branch_forward.1} parent=35 // pred_check
          %p1770 = pneg %p130
        $region46: #{branch_forward.1} parent=35 // pred_check_branch
          %1772 = sbr.rel (%p1770) target = $region48
        $region47: #{branch_forward.1} parent=35 // pred_region
          %s1773 = smul.u32 4, %s23
          %s1775 = ssub.s32 128, 128
          %1776 = vsyncadd %s1766, %s1775
          %s1777 = smul.addr %s1773, 32
          %s1778 = scalar_lea.hbm %s5, %s1777
          %s1780 = sshll.u32 %s1769, 4
          %s1781 = int_to_ptr.vmem [resolvable:$true] %s1780
          %1783 = dma.vmem_to_hbm [thread:$0]  %s1781, 128, %s1778, %s1766
        $region48: #{branch_forward.1} parent=35 // pred_fallthru
          _
      $region36: #{branch_forward.1} parent=5 // pred_fallthru
        _
      %p1784 = scmp.le.s32.totalorder 2, %s18
      // Predicated region
      $region49: #{branch_forward.1} parent=5 // pred_check
        %p1785 = pneg %p1784
      $region50: #{branch_forward.1} parent=5 // pred_check_branch
        %1787 = sbr.rel (%p1785) target = $region52
      $region51: #{branch_forward.1} parent=5 // pred_region
        %s1788 = ssub.s32 %s18, 2
        // Predicated region
        $region53: #{branch_forward.1} parent=51 // pred_check
          %p1789 = pneg %p136
        $region54: #{branch_forward.1} parent=51 // pred_check_branch
          %1791 = sbr.rel (%p1789) target = $region56
        $region55: #{branch_forward.1} parent=51 // pred_region
          %s1792 = sand.u32 %s121, 1
          %s1793 = scalar_lea.sflag [#allocation6], %s1792
          %s1794 = sand.u32 %s121, 1
          %s1795 = smul.addr %s1794, 8
          %s1796 = scalar_lea.vmem [#allocation9], %s1795
          %1797 = dma.done %s1793, 128
        $region56: #{branch_forward.1} parent=51 // pred_fallthru
          _
      $region52: #{branch_forward.1} parent=5 // pred_fallthru
        _
    $region6: #{branch_forward.1} parent=1 // loop_footer
      %s22 = sadd.s32 1, %s18
    $region7: #{branch_forward.1} parent=1 // loop_footer_branch
      %17 = sbr.rel target = $region3
    $region8: #{branch_forward.1} parent=1 // loop_exit
      _
    %1798 = vsyncpa [#allocation5], 1
    %s1799 = scalar_lea.sflag [#allocation5], 1
    %1800 = vsyncpa %s1799, 1
    %1801 = vsyncpa [#allocation8], 1
    %s1802 = scalar_lea.sflag [#allocation8], 1
    %1803 = vsyncpa %s1802, 1
    %1804 = vsyncpa [#allocation6], 1
    %s1805 = scalar_lea.sflag [#allocation6], 1
    %1806 = vsyncpa %s1805, 1
  %1807 = vsyncmov [#allocation3]
  %s1808 = vpop.sfrf %1807
  %p1809 = scmp.eq.s32.totalorder %s1808, 0
  %p1810 = pneg %p1809
  %1812 = shalt.err (%p1810)

</llo_original>
